<compile_context>
chip_gen: v7x
topology: tpu7x:2x2x1
jax: 0.10.0
libtpu: 0.0.40
codegen_flags: <defaults>
</compile_context>

<pallas_src>
import jax
import jax.numpy as jnp
from jax import lax
from jax.experimental import pallas as pl
from jax.experimental.pallas import tpu as pltpu


# ----------------------------- fused Pallas kernel ----------------------------- #

def _down_fused_kernel(xr_ref, w1_ref, s1_ref, b1_ref, w2_ref, s2_ref, b2_ref,
                       o_ref, pad1_ref, pad2_ref):
    """One batch element: MaxPool2x2 -> [Conv3x3 -> BN -> ReLU] x 2, all in VMEM.

    xr_ref : (1, Hh, 2, Wh, 2*Cin)  pooling-friendly regroup of the NHWC input (input dtype)
    w1_ref : (9, Cin, Cmid) bf16    conv1 weight, tap k = dy*3 + dx
    s1/b1  : (1, Cmid) f32          folded BatchNorm1 scale / bias
    w2_ref : (9, Cmid, Cout) bf16   conv2 weight
    s2/b2  : (1, Cout) f32          folded BatchNorm2 scale / bias
    o_ref  : (1, Hh*Wh, Cout) f32   NHWC output with the pixel axis flattened
    pad1/pad2 : f32 VMEM scratch (Hh+2, Wp, C), Wp = roundup(Wh+2, 8)
    """
    _, Hh, _, Wh, _ = xr_ref.shape
    cin = pad1_ref.shape[-1]

    # ---- MaxPool2d(2) in the input dtype (no f32 upcast of the DMA'd activation) ----
    x = xr_ref[0]                                              # (Hh, 2, Wh, 2*Cin)
    rmax = jnp.maximum(x[:, 0], x[:, 1])                       # (Hh, Wh, 2*Cin)
    pooled = jnp.maximum(rmax[:, :, :cin], rmax[:, :, cin:])   # (Hh, Wh, Cin)

    def conv3x3_bn_relu(p, pad_ref, w_ref, s_ref, b_ref):
        """3x3 'same' conv + folded BN + ReLU.  p: (Hh, Wh, C) -> (Hh*Wh, Cout) f32."""
        c = pad_ref.shape[-1]
        n_out = w_ref.shape[-1]
        wp = pad_ref.shape[1]

        # Zero ONLY the 1-pixel halo ring each step (perimeter, not area): the interior is
        # fully overwritten below and pad columns >= Wh+2 are never read by any tap.
        # NOTE: nothing else may ever write the border ring.
        zrow = jnp.zeros((1, wp, c), pad_ref.dtype)
        zcol = jnp.zeros((Hh, 1, c), pad_ref.dtype)
        pad_ref[0:1, :, :] = zrow
        pad_ref[Hh + 1:Hh + 2, :, :] = zrow
        pad_ref[1:Hh + 1, 0:1, :] = zcol
        pad_ref[1:Hh + 1, Wh + 1:Wh + 2, :] = zcol
        pad_ref[1:Hh + 1, 1:Wh + 1, :] = p.astype(pad_ref.dtype)

        if c < 128:
            # Tiny-channel path (this toy test): concat-im2col -> ONE MXU matmul so the
            # contraction dim is 9*C instead of C.
            cols = [pad_ref[dy:dy + Hh, dx:dx + Wh, :].reshape(Hh * Wh, c)
                    for dy in range(3) for dx in range(3)]
            slab = jnp.concatenate(cols, axis=-1).astype(jnp.bfloat16)   # (HW, 9*C) bf16
            w_flat = w_ref[...].reshape(9 * c, n_out)                    # bf16
            y = jnp.dot(slab, w_flat, preferred_element_type=jnp.float32)
        else:
            # Realistic-channel path (C >= 128): nine accumulating bf16 matmuls — no 9x
            # im2col slab in VMEM, K = C already saturates the MXU systolic array.
            y = jnp.zeros((Hh * Wh, n_out), jnp.float32)
            for dy in range(3):
                for dx in range(3):
                    patch = pad_ref[dy:dy + Hh, dx:dx + Wh, :]
                    patch = patch.reshape(Hh * Wh, c).astype(jnp.bfloat16)
                    y = y + jnp.dot(patch, w_ref[dy * 3 + dx],
                                    preferred_element_type=jnp.float32)

        y = y * s_ref[...] + b_ref[...]          # folded BatchNorm (f32 epilogue)
        return jnp.maximum(y, 0.0)               # ReLU, (Hh*Wh, n_out) f32

    y1 = conv3x3_bn_relu(pooled, pad1_ref, w1_ref, s1_ref, b1_ref)   # (Hh*Wh, Cmid)
    y1 = y1.reshape(Hh, Wh, y1.shape[-1])
    y2 = conv3x3_bn_relu(y1, pad2_ref, w2_ref, s2_ref, b2_ref)       # (Hh*Wh, Cout)

    # NHWC store (lane-dense for real Cout >= 128); no per-step XLU transpose.
    o_ref[0] = y2.astype(o_ref.dtype)


# --------------------------------- JAX wrapper --------------------------------- #

def _round_up(v, m):
    return (v + m - 1) // m * m


def down_forward(x_nchw, params):
    """Down.forward: MaxPool2d(2) -> Conv3x3 -> BN -> ReLU -> Conv3x3 -> BN -> ReLU."""
    N, Cin, H, W = x_nchw.shape
    assert H % 2 == 0 and W % 2 == 0, "MaxPool2d(2) regroup requires even H and W"
    Hh, Wh = H // 2, W // 2
    w1, w2 = params["w1"], params["w2"]
    Cmid, Cout = w1.shape[-1], w2.shape[-1]

    # TODO(synk): both permutes vanish if the surrounding network keeps NHWC end-to-end.
    x_nhwc = jnp.transpose(x_nchw, (0, 2, 3, 1))            # keep input dtype (no f32 upcast)
    xr = x_nhwc.reshape(N, Hh, 2, Wh, 2 * Cin)              # free regroup for the 2x2 pool

    # bf16 weights feed the MXU natively; BN scale/bias stay f32 for the epilogue.
    w1r = w1.reshape(9, Cin, Cmid).astype(jnp.bfloat16)     # tap k = dy*3 + dx
    w2r = w2.reshape(9, Cmid, Cout).astype(jnp.bfloat16)
    s1 = params["scale1"].reshape(1, Cmid).astype(jnp.float32)
    b1 = params["bias1"].reshape(1, Cmid).astype(jnp.float32)
    s2 = params["scale2"].reshape(1, Cout).astype(jnp.float32)
    b2 = params["bias2"].reshape(1, Cout).astype(jnp.float32)

    Wp = _round_up(Wh + 2, 8)   # sublane-align the pad scratch second-to-last dim

    flops = 2 * N * Hh * Wh * 9 * (Cin * Cmid + Cmid * Cout)
    bytes_accessed = (xr.size * xr.dtype.itemsize
                      + w1r.size * w1r.dtype.itemsize + w2r.size * w2r.dtype.itemsize
                      + (s1.size + b1.size + s2.size + b2.size) * 4
                      + N * Hh * Wh * Cout * 4)

    out = pl.pallas_call(
        _down_fused_kernel,
        out_shape=jax.ShapeDtypeStruct((N, Hh * Wh, Cout), jnp.float32),
        grid=(N,),
        in_specs=[
            pl.BlockSpec((1, Hh, 2, Wh, 2 * Cin), lambda n: (n, 0, 0, 0, 0)),
            pl.BlockSpec((9, Cin, Cmid), lambda n: (0, 0, 0)),
            pl.BlockSpec((1, Cmid), lambda n: (0, 0)),
            pl.BlockSpec((1, Cmid), lambda n: (0, 0)),
            pl.BlockSpec((9, Cmid, Cout), lambda n: (0, 0, 0)),
            pl.BlockSpec((1, Cout), lambda n: (0, 0)),
            pl.BlockSpec((1, Cout), lambda n: (0, 0)),
        ],
        out_specs=pl.BlockSpec((1, Hh * Wh, Cout), lambda n: (n, 0, 0)),
        scratch_shapes=[
            pltpu.VMEM((Hh + 2, Wp, Cin), jnp.float32),
            pltpu.VMEM((Hh + 2, Wp, Cmid), jnp.float32),
        ],
        compiler_params=pltpu.CompilerParams(
            dimension_semantics=("parallel",),          # batch elems independent (megacore)
            vmem_limit_bytes=32 * 1024 * 1024),         # raise the 16 MiB v5e default
        cost_estimate=pl.CostEstimate(flops=flops, transcendentals=0,
                                      bytes_accessed=bytes_accessed),
    )(xr, w1r, s1, b1, w2r, s2, b2)

    # Single output permute back to NCHW in XLA (not per grid step in the kernel).
    return jnp.transpose(out.reshape(N, Hh, Wh, Cout), (0, 3, 1, 2))


# --------------------------- parameters / reference ---------------------------- #

def fold_bn(gamma, beta, mean, var, eps=1e-5):
    scale = gamma / jnp.sqrt(var + eps)
    return scale, beta - mean * scale


def make_params(key, in_channels, out_channels):
    mid_channels = out_channels
    ks = jax.random.split(key, 10)
    # conv weights in HWIO (== torch OIHW transposed (2,3,1,0)), bias=False
    w1 = 0.2 * jax.random.normal(ks[0], (3, 3, in_channels, mid_channels), jnp.float32)
    w2 = 0.2 * jax.random.normal(ks[1], (3, 3, mid_channels, out_channels), jnp.float32)
    g1 = jax.random.uniform(ks[2], (mid_channels,), jnp.float32, 0.5, 1.5)
    b1 = 0.1 * jax.random.normal(ks[3], (mid_channels,), jnp.float32)
    m1 = 0.1 * jax.random.normal(ks[4], (mid_channels,), jnp.float32)
    v1 = jax.random.uniform(ks[5], (mid_channels,), jnp.float32, 0.5, 1.5)
    g2 = jax.random.uniform(ks[6], (out_channels,), jnp.float32, 0.5, 1.5)
    b2 = 0.1 * jax.random.normal(ks[7], (out_channels,), jnp.float32)
    m2 = 0.1 * jax.random.normal(ks[8], (out_channels,), jnp.float32)
    v2 = jax.random.uniform(ks[9], (out_channels,), jnp.float32, 0.5, 1.5)
    s1, bias1 = fold_bn(g1, b1, m1, v1)
    s2, bias2 = fold_bn(g2, b2, m2, v2)
    return {"w1": w1, "scale1": s1, "bias1": bias1,
            "w2": w2, "scale2": s2, "bias2": bias2}


def reference_forward(x_nchw, params):
    """Pure f32 JAX reference of the PyTorch Down forward (inference-mode BN)."""
    x = jnp.transpose(x_nchw, (0, 2, 3, 1))
    x = lax.reduce_window(x, -jnp.inf, lax.max, (1, 2, 2, 1), (1, 2, 2, 1), "VALID")
    for w, s, b in ((params["w1"], params["scale1"], params["bias1"]),
                    (params["w2"], params["scale2"], params["bias2"])):
        x = lax.conv_general_dilated(x, w, (1, 1), "SAME",
                                     dimension_numbers=("NHWC", "HWIO", "NHWC"))
        x = jnp.maximum(x * s + b, 0.0)
    return jnp.transpose(x, (0, 3, 1, 2))


# ------------------------------------ main ------------------------------------- #

if __name__ == "__main__":
    key = jax.random.PRNGKey(0)
    k_x, k_p = jax.random.split(key)

    N, Cin, H, W = 2, 4, 16, 16
    Cout = 8
    x = jax.random.normal(k_x, (N, Cin, H, W), jnp.float32)   # NCHW, like torch
    params = make_params(k_p, Cin, Cout)

    out = down_forward(x, params)
    out = jax.block_until_ready(out)

    ref = reference_forward(x, params)
    assert out.shape == (N, Cout, H // 2, W // 2), out.shape
    # bf16 MXU inputs (f32 accumulation) vs a pure-f32 reference -> bf16-aware tolerance.
    assert jnp.allclose(out, ref, atol=1e-1, rtol=5e-2), "mismatch vs JAX reference"
    assert float(jnp.mean(jnp.abs(out - ref))) < 3e-2, "mean error too large vs reference"

    print("KERNEL_OK")
</pallas_src>

<mosaic_0001>
module attributes {stable_mosaic.version = 11 : i64} {
  func.func @_down_fused_kernel(%arg0: i32, %arg1: memref<1x8x2x8x8xf32, #tpu.memory_space<vmem>>, %arg2: memref<9x4x8xbf16, #tpu.memory_space<vmem>>, %arg3: memref<1x8xf32, #tpu.memory_space<vmem>>, %arg4: memref<1x8xf32, #tpu.memory_space<vmem>>, %arg5: memref<9x8x8xbf16, #tpu.memory_space<vmem>>, %arg6: memref<1x8xf32, #tpu.memory_space<vmem>>, %arg7: memref<1x8xf32, #tpu.memory_space<vmem>>, %arg8: memref<1x64x8xf32, #tpu.memory_space<vmem>>, %arg9: memref<10x16x4xf32, #tpu.memory_space<vmem>>, %arg10: memref<10x16x8xf32, #tpu.memory_space<vmem>>) attributes {dimension_semantics = [#tpu.dimension_semantics<parallel>], iteration_bounds = array<i64: 2>, scalar_prefetch = 0 : i64, scratch_operands = 2 : i64, tpu.core_type = #tpu.core_type<tc>, window_params = [{transform_indices = @transform_0, window_bounds = array<i64: 1, 8, 2, 8, 8>}, {pipeline_mode = #tpu.pipeline_mode<synchronous>, transform_indices = @transform_1, window_bounds = array<i64: 9, 4, 8>}, {pipeline_mode = #tpu.pipeline_mode<synchronous>, transform_indices = @transform_2, window_bounds = array<i64: 1, 8>}, {pipeline_mode = #tpu.pipeline_mode<synchronous>, transform_indices = @transform_3, window_bounds = array<i64: 1, 8>}, {pipeline_mode = #tpu.pipeline_mode<synchronous>, transform_indices = @transform_4, window_bounds = array<i64: 9, 8, 8>}, {pipeline_mode = #tpu.pipeline_mode<synchronous>, transform_indices = @transform_5, window_bounds = array<i64: 1, 8>}, {pipeline_mode = #tpu.pipeline_mode<synchronous>, transform_indices = @transform_6, window_bounds = array<i64: 1, 8>}, {transform_indices = @transform_7, window_bounds = array<i64: 1, 64, 8>}]} {
    %c0 = arith.constant 0 : index
    %c0_0 = arith.constant 0 : index
    %c0_1 = arith.constant 0 : index
    %c0_2 = arith.constant 0 : index
    %c0_3 = arith.constant 0 : index
    %0 = vector.load %arg1[%c0, %c0_0, %c0_1, %c0_2, %c0_3] : memref<1x8x2x8x8xf32, #tpu.memory_space<vmem>>, vector<1x8x2x8x8xf32>
    %1 = vector.shape_cast %0 : vector<1x8x2x8x8xf32> to vector<8x2x8x8xf32>
    %2 = vector.extract_strided_slice %1 {offsets = [0, 0, 0, 0], sizes = [8, 1, 8, 8], strides = [1, 1, 1, 1]} : vector<8x2x8x8xf32> to vector<8x1x8x8xf32>
    %3 = vector.shape_cast %2 : vector<8x1x8x8xf32> to vector<8x8x8xf32>
    %4 = vector.extract_strided_slice %1 {offsets = [0, 1, 0, 0], sizes = [8, 1, 8, 8], strides = [1, 1, 1, 1]} : vector<8x2x8x8xf32> to vector<8x1x8x8xf32>
    %5 = vector.shape_cast %4 : vector<8x1x8x8xf32> to vector<8x8x8xf32>
    %6 = arith.maximumf %3, %5 : vector<8x8x8xf32>
    %7 = vector.extract_strided_slice %6 {offsets = [0, 0, 0], sizes = [8, 8, 4], strides = [1, 1, 1]} : vector<8x8x8xf32> to vector<8x8x4xf32>
    %8 = vector.extract_strided_slice %6 {offsets = [0, 0, 4], sizes = [8, 8, 4], strides = [1, 1, 1]} : vector<8x8x8xf32> to vector<8x8x4xf32>
    %9 = arith.maximumf %7, %8 : vector<8x8x4xf32>
    %cst = arith.constant 0.000000e+00 : f32
    %10 = vector.broadcast %cst : f32 to vector<1x16x4xf32>
    %cst_4 = arith.constant 0.000000e+00 : f32
    %11 = vector.broadcast %cst_4 : f32 to vector<8x1x4xf32>
    %c0_5 = arith.constant 0 : index
    %c0_6 = arith.constant 0 : index
    %c0_7 = arith.constant 0 : index
    %12 = vector.load %arg9[%c0_5, %c0_6, %c0_7] : memref<10x16x4xf32, #tpu.memory_space<vmem>>, vector<1x16x4xf32>
    tpu.vector_store %arg9[%c0_5, %c0_6, %c0_7], %10 {strides = array<i32>} : memref<10x16x4xf32, #tpu.memory_space<vmem>>, vector<1x16x4xf32>,
    %c9 = arith.constant 9 : index
    %c0_8 = arith.constant 0 : index
    %c0_9 = arith.constant 0 : index
    %13 = vector.load %arg9[%c9, %c0_8, %c0_9] : memref<10x16x4xf32, #tpu.memory_space<vmem>>, vector<1x16x4xf32>
    tpu.vector_store %arg9[%c9, %c0_8, %c0_9], %10 {strides = array<i32>} : memref<10x16x4xf32, #tpu.memory_space<vmem>>, vector<1x16x4xf32>,
    %c1 = arith.constant 1 : index
    %c0_10 = arith.constant 0 : index
    %c0_11 = arith.constant 0 : index
    %14 = vector.load %arg9[%c1, %c0_10, %c0_11] : memref<10x16x4xf32, #tpu.memory_space<vmem>>, vector<8x1x4xf32>
    tpu.vector_store %arg9[%c1, %c0_10, %c0_11], %11 {strides = array<i32>} : memref<10x16x4xf32, #tpu.memory_space<vmem>>, vector<8x1x4xf32>,
    %c1_12 = arith.constant 1 : index
    %c9_13 = arith.constant 9 : index
    %c0_14 = arith.constant 0 : index
    %15 = vector.load %arg9[%c1_12, %c9_13, %c0_14] : memref<10x16x4xf32, #tpu.memory_space<vmem>>, vector<8x1x4xf32>
    tpu.vector_store %arg9[%c1_12, %c9_13, %c0_14], %11 {strides = array<i32>} : memref<10x16x4xf32, #tpu.memory_space<vmem>>, vector<8x1x4xf32>,
    %c1_15 = arith.constant 1 : index
    %c1_16 = arith.constant 1 : index
    %c0_17 = arith.constant 0 : index
    %16 = vector.load %arg9[%c1_15, %c1_16, %c0_17] : memref<10x16x4xf32, #tpu.memory_space<vmem>>, vector<8x8x4xf32>
    tpu.vector_store %arg9[%c1_15, %c1_16, %c0_17], %9 {strides = array<i32>} : memref<10x16x4xf32, #tpu.memory_space<vmem>>, vector<8x8x4xf32>,
    %c0_18 = arith.constant 0 : index
    %c0_19 = arith.constant 0 : index
    %c0_20 = arith.constant 0 : index
    %17 = vector.load %arg9[%c0_18, %c0_19, %c0_20] : memref<10x16x4xf32, #tpu.memory_space<vmem>>, vector<8x8x4xf32>
    %18 = vector.shape_cast %17 : vector<8x8x4xf32> to vector<64x4xf32>
    %c0_21 = arith.constant 0 : index
    %c1_22 = arith.constant 1 : index
    %c0_23 = arith.constant 0 : index
    %19 = vector.load %arg9[%c0_21, %c1_22, %c0_23] : memref<10x16x4xf32, #tpu.memory_space<vmem>>, vector<8x8x4xf32>
    %20 = vector.shape_cast %19 : vector<8x8x4xf32> to vector<64x4xf32>
    %c0_24 = arith.constant 0 : index
    %c2 = arith.constant 2 : index
    %c0_25 = arith.constant 0 : index
    %21 = vector.load %arg9[%c0_24, %c2, %c0_25] : memref<10x16x4xf32, #tpu.memory_space<vmem>>, vector<8x8x4xf32>
    %22 = vector.shape_cast %21 : vector<8x8x4xf32> to vector<64x4xf32>
    %c1_26 = arith.constant 1 : index
    %c0_27 = arith.constant 0 : index
    %c0_28 = arith.constant 0 : index
    %23 = vector.load %arg9[%c1_26, %c0_27, %c0_28] : memref<10x16x4xf32, #tpu.memory_space<vmem>>, vector<8x8x4xf32>
    %24 = vector.shape_cast %23 : vector<8x8x4xf32> to vector<64x4xf32>
    %c1_29 = arith.constant 1 : index
    %c1_30 = arith.constant 1 : index
    %c0_31 = arith.constant 0 : index
    %25 = vector.load %arg9[%c1_29, %c1_30, %c0_31] : memref<10x16x4xf32, #tpu.memory_space<vmem>>, vector<8x8x4xf32>
    %26 = vector.shape_cast %25 : vector<8x8x4xf32> to vector<64x4xf32>
    %c1_32 = arith.constant 1 : index
    %c2_33 = arith.constant 2 : index
    %c0_34 = arith.constant 0 : index
    %27 = vector.load %arg9[%c1_32, %c2_33, %c0_34] : memref<10x16x4xf32, #tpu.memory_space<vmem>>, vector<8x8x4xf32>
    %28 = vector.shape_cast %27 : vector<8x8x4xf32> to vector<64x4xf32>
    %c2_35 = arith.constant 2 : index
    %c0_36 = arith.constant 0 : index
    %c0_37 = arith.constant 0 : index
    %29 = vector.load %arg9[%c2_35, %c0_36, %c0_37] : memref<10x16x4xf32, #tpu.memory_space<vmem>>, vector<8x8x4xf32>
    %30 = vector.shape_cast %29 : vector<8x8x4xf32> to vector<64x4xf32>
    %c2_38 = arith.constant 2 : index
    %c1_39 = arith.constant 1 : index
    %c0_40 = arith.constant 0 : index
    %31 = vector.load %arg9[%c2_38, %c1_39, %c0_40] : memref<10x16x4xf32, #tpu.memory_space<vmem>>, vector<8x8x4xf32>
    %32 = vector.shape_cast %31 : vector<8x8x4xf32> to vector<64x4xf32>
    %c2_41 = arith.constant 2 : index
    %c2_42 = arith.constant 2 : index
    %c0_43 = arith.constant 0 : index
    %33 = vector.load %arg9[%c2_41, %c2_42, %c0_43] : memref<10x16x4xf32, #tpu.memory_space<vmem>>, vector<8x8x4xf32>
    %34 = vector.shape_cast %33 : vector<8x8x4xf32> to vector<64x4xf32>
    %35 = tpu.concatenate %18, %20, %22, %24, %26, %28, %30, %32, %34 in 1 : vector<64x4xf32>, vector<64x4xf32>, vector<64x4xf32>, vector<64x4xf32>, vector<64x4xf32>, vector<64x4xf32>, vector<64x4xf32>, vector<64x4xf32>, vector<64x4xf32> -> vector<64x36xf32>
    %36 = arith.truncf %35 : vector<64x36xf32> to vector<64x36xbf16>
    %c0_44 = arith.constant 0 : index
    %c0_45 = arith.constant 0 : index
    %c0_46 = arith.constant 0 : index
    %37 = vector.load %arg2[%c0_44, %c0_45, %c0_46] : memref<9x4x8xbf16, #tpu.memory_space<vmem>>, vector<9x4x8xbf16>
    %38 = vector.shape_cast %37 : vector<9x4x8xbf16> to vector<36x8xbf16>
    %cst_47 = arith.constant dense<0.000000e+00> : vector<64x8xf32>
    %39 = tpu.matmul %36, %38, %cst_47 {dimension_numbers = #tpu.dot_dimension_numbers<[1], [0], [0], [1], [0, 0, 1, 1], [], []>} : vector<64x36xbf16>, vector<36x8xbf16>, vector<64x8xf32> -> vector<64x8xf32>
    %c0_48 = arith.constant 0 : index
    %c0_49 = arith.constant 0 : index
    %40 = vector.load %arg3[%c0_48, %c0_49] : memref<1x8xf32, #tpu.memory_space<vmem>>, vector<1x8xf32>
    %41 = vector.broadcast %40 : vector<1x8xf32> to vector<64x8xf32>
    %42 = arith.mulf %39, %41 : vector<64x8xf32>
    %c0_50 = arith.constant 0 : index
    %c0_51 = arith.constant 0 : index
    %43 = vector.load %arg4[%c0_50, %c0_51] : memref<1x8xf32, #tpu.memory_space<vmem>>, vector<1x8xf32>
    %44 = vector.broadcast %43 : vector<1x8xf32> to vector<64x8xf32>
    %45 = arith.addf %42, %44 : vector<64x8xf32>
    %cst_52 = arith.constant 0.000000e+00 : f32
    %46 = vector.broadcast %cst_52 : f32 to vector<64x8xf32>
    %47 = arith.maximumf %45, %46 : vector<64x8xf32>
    %48 = vector.shape_cast %47 : vector<64x8xf32> to vector<8x8x8xf32>
    %cst_53 = arith.constant 0.000000e+00 : f32
    %49 = vector.broadcast %cst_53 : f32 to vector<1x16x8xf32>
    %cst_54 = arith.constant 0.000000e+00 : f32
    %50 = vector.broadcast %cst_54 : f32 to vector<8x1x8xf32>
    %c0_55 = arith.constant 0 : index
    %c0_56 = arith.constant 0 : index
    %c0_57 = arith.constant 0 : index
    %51 = vector.load %arg10[%c0_55, %c0_56, %c0_57] : memref<10x16x8xf32, #tpu.memory_space<vmem>>, vector<1x16x8xf32>
    tpu.vector_store %arg10[%c0_55, %c0_56, %c0_57], %49 {strides = array<i32>} : memref<10x16x8xf32, #tpu.memory_space<vmem>>, vector<1x16x8xf32>,
    %c9_58 = arith.constant 9 : index
    %c0_59 = arith.constant 0 : index
    %c0_60 = arith.constant 0 : index
    %52 = vector.load %arg10[%c9_58, %c0_59, %c0_60] : memref<10x16x8xf32, #tpu.memory_space<vmem>>, vector<1x16x8xf32>
    tpu.vector_store %arg10[%c9_58, %c0_59, %c0_60], %49 {strides = array<i32>} : memref<10x16x8xf32, #tpu.memory_space<vmem>>, vector<1x16x8xf32>,
    %c1_61 = arith.constant 1 : index
    %c0_62 = arith.constant 0 : index
    %c0_63 = arith.constant 0 : index
    %53 = vector.load %arg10[%c1_61, %c0_62, %c0_63] : memref<10x16x8xf32, #tpu.memory_space<vmem>>, vector<8x1x8xf32>
    tpu.vector_store %arg10[%c1_61, %c0_62, %c0_63], %50 {strides = array<i32>} : memref<10x16x8xf32, #tpu.memory_space<vmem>>, vector<8x1x8xf32>,
    %c1_64 = arith.constant 1 : index
    %c9_65 = arith.constant 9 : index
    %c0_66 = arith.constant 0 : index
    %54 = vector.load %arg10[%c1_64, %c9_65, %c0_66] : memref<10x16x8xf32, #tpu.memory_space<vmem>>, vector<8x1x8xf32>
    tpu.vector_store %arg10[%c1_64, %c9_65, %c0_66], %50 {strides = array<i32>} : memref<10x16x8xf32, #tpu.memory_space<vmem>>, vector<8x1x8xf32>,
    %c1_67 = arith.constant 1 : index
    %c1_68 = arith.constant 1 : index
    %c0_69 = arith.constant 0 : index
    %55 = vector.load %arg10[%c1_67, %c1_68, %c0_69] : memref<10x16x8xf32, #tpu.memory_space<vmem>>, vector<8x8x8xf32>
    tpu.vector_store %arg10[%c1_67, %c1_68, %c0_69], %48 {strides = array<i32>} : memref<10x16x8xf32, #tpu.memory_space<vmem>>, vector<8x8x8xf32>,
    %c0_70 = arith.constant 0 : index
    %c0_71 = arith.constant 0 : index
    %c0_72 = arith.constant 0 : index
    %56 = vector.load %arg10[%c0_70, %c0_71, %c0_72] : memref<10x16x8xf32, #tpu.memory_space<vmem>>, vector<8x8x8xf32>
    %57 = vector.shape_cast %56 : vector<8x8x8xf32> to vector<64x8xf32>
    %c0_73 = arith.constant 0 : index
    %c1_74 = arith.constant 1 : index
    %c0_75 = arith.constant 0 : index
    %58 = vector.load %arg10[%c0_73, %c1_74, %c0_75] : memref<10x16x8xf32, #tpu.memory_space<vmem>>, vector<8x8x8xf32>
    %59 = vector.shape_cast %58 : vector<8x8x8xf32> to vector<64x8xf32>
    %c0_76 = arith.constant 0 : index
    %c2_77 = arith.constant 2 : index
    %c0_78 = arith.constant 0 : index
    %60 = vector.load %arg10[%c0_76, %c2_77, %c0_78] : memref<10x16x8xf32, #tpu.memory_space<vmem>>, vector<8x8x8xf32>
    %61 = vector.shape_cast %60 : vector<8x8x8xf32> to vector<64x8xf32>
    %c1_79 = arith.constant 1 : index
    %c0_80 = arith.constant 0 : index
    %c0_81 = arith.constant 0 : index
    %62 = vector.load %arg10[%c1_79, %c0_80, %c0_81] : memref<10x16x8xf32, #tpu.memory_space<vmem>>, vector<8x8x8xf32>
    %63 = vector.shape_cast %62 : vector<8x8x8xf32> to vector<64x8xf32>
    %c1_82 = arith.constant 1 : index
    %c1_83 = arith.constant 1 : index
    %c0_84 = arith.constant 0 : index
    %64 = vector.load %arg10[%c1_82, %c1_83, %c0_84] : memref<10x16x8xf32, #tpu.memory_space<vmem>>, vector<8x8x8xf32>
    %65 = vector.shape_cast %64 : vector<8x8x8xf32> to vector<64x8xf32>
    %c1_85 = arith.constant 1 : index
    %c2_86 = arith.constant 2 : index
    %c0_87 = arith.constant 0 : index
    %66 = vector.load %arg10[%c1_85, %c2_86, %c0_87] : memref<10x16x8xf32, #tpu.memory_space<vmem>>, vector<8x8x8xf32>
    %67 = vector.shape_cast %66 : vector<8x8x8xf32> to vector<64x8xf32>
    %c2_88 = arith.constant 2 : index
    %c0_89 = arith.constant 0 : index
    %c0_90 = arith.constant 0 : index
    %68 = vector.load %arg10[%c2_88, %c0_89, %c0_90] : memref<10x16x8xf32, #tpu.memory_space<vmem>>, vector<8x8x8xf32>
    %69 = vector.shape_cast %68 : vector<8x8x8xf32> to vector<64x8xf32>
    %c2_91 = arith.constant 2 : index
    %c1_92 = arith.constant 1 : index
    %c0_93 = arith.constant 0 : index
    %70 = vector.load %arg10[%c2_91, %c1_92, %c0_93] : memref<10x16x8xf32, #tpu.memory_space<vmem>>, vector<8x8x8xf32>
    %71 = vector.shape_cast %70 : vector<8x8x8xf32> to vector<64x8xf32>
    %c2_94 = arith.constant 2 : index
    %c2_95 = arith.constant 2 : index
    %c0_96 = arith.constant 0 : index
    %72 = vector.load %arg10[%c2_94, %c2_95, %c0_96] : memref<10x16x8xf32, #tpu.memory_space<vmem>>, vector<8x8x8xf32>
    %73 = vector.shape_cast %72 : vector<8x8x8xf32> to vector<64x8xf32>
    %74 = tpu.concatenate %57, %59, %61, %63, %65, %67, %69, %71, %73 in 1 : vector<64x8xf32>, vector<64x8xf32>, vector<64x8xf32>, vector<64x8xf32>, vector<64x8xf32>, vector<64x8xf32>, vector<64x8xf32>, vector<64x8xf32>, vector<64x8xf32> -> vector<64x72xf32>
    %75 = arith.truncf %74 : vector<64x72xf32> to vector<64x72xbf16>
    %c0_97 = arith.constant 0 : index
    %c0_98 = arith.constant 0 : index
    %c0_99 = arith.constant 0 : index
    %76 = vector.load %arg5[%c0_97, %c0_98, %c0_99] : memref<9x8x8xbf16, #tpu.memory_space<vmem>>, vector<9x8x8xbf16>
    %77 = vector.shape_cast %76 : vector<9x8x8xbf16> to vector<72x8xbf16>
    %cst_100 = arith.constant dense<0.000000e+00> : vector<64x8xf32>
    %78 = tpu.matmul %75, %77, %cst_100 {dimension_numbers = #tpu.dot_dimension_numbers<[1], [0], [0], [1], [0, 0, 1, 1], [], []>} : vector<64x72xbf16>, vector<72x8xbf16>, vector<64x8xf32> -> vector<64x8xf32>
    %c0_101 = arith.constant 0 : index
    %c0_102 = arith.constant 0 : index
    %79 = vector.load %arg6[%c0_101, %c0_102] : memref<1x8xf32, #tpu.memory_space<vmem>>, vector<1x8xf32>
    %80 = vector.broadcast %79 : vector<1x8xf32> to vector<64x8xf32>
    %81 = arith.mulf %78, %80 : vector<64x8xf32>
    %c0_103 = arith.constant 0 : index
    %c0_104 = arith.constant 0 : index
    %82 = vector.load %arg7[%c0_103, %c0_104] : memref<1x8xf32, #tpu.memory_space<vmem>>, vector<1x8xf32>
    %83 = vector.broadcast %82 : vector<1x8xf32> to vector<64x8xf32>
    %84 = arith.addf %81, %83 : vector<64x8xf32>
    %cst_105 = arith.constant 0.000000e+00 : f32
    %85 = vector.broadcast %cst_105 : f32 to vector<64x8xf32>
    %86 = arith.maximumf %84, %85 : vector<64x8xf32>
    %c0_106 = arith.constant 0 : index
    %c0_107 = arith.constant 0 : index
    %c0_108 = arith.constant 0 : index
    %87 = vector.load %arg8[%c0_106, %c0_107, %c0_108] : memref<1x64x8xf32, #tpu.memory_space<vmem>>, vector<1x64x8xf32>
    %88 = vector.shape_cast %87 : vector<1x64x8xf32> to vector<64x8xf32>
    %89 = vector.shape_cast %86 : vector<64x8xf32> to vector<1x64x8xf32>
    tpu.vector_store %arg8[%c0_106, %c0_107, %c0_108], %89 {strides = array<i32>} : memref<1x64x8xf32, #tpu.memory_space<vmem>>, vector<1x64x8xf32>,
    return
  }
  func.func @transform_0(%arg0: i32) -> (i32, i32, i32, i32, i32) {
    %c0_i32 = arith.constant 0 : i32
    %c0_i32_0 = arith.constant 0 : i32
    %c0_i32_1 = arith.constant 0 : i32
    %c0_i32_2 = arith.constant 0 : i32
    %c0_i32_3 = arith.constant 0 : i32
    return %arg0, %c0_i32, %c0_i32_0, %c0_i32_1, %c0_i32_2 : i32, i32, i32, i32, i32
  }
  func.func @transform_1(%arg0: i32) -> (i32, i32, i32) {
    %c0_i32 = arith.constant 0 : i32
    %c0_i32_0 = arith.constant 0 : i32
    %c0_i32_1 = arith.constant 0 : i32
    %c0_i32_2 = arith.constant 0 : i32
    return %c0_i32, %c0_i32_0, %c0_i32_1 : i32, i32, i32
  }
  func.func @transform_2(%arg0: i32) -> (i32, i32) {
    %c0_i32 = arith.constant 0 : i32
    %c0_i32_0 = arith.constant 0 : i32
    %c0_i32_1 = arith.constant 0 : i32
    return %c0_i32, %c0_i32_0 : i32, i32
  }
  func.func @transform_3(%arg0: i32) -> (i32, i32) {
    %c0_i32 = arith.constant 0 : i32
    %c0_i32_0 = arith.constant 0 : i32
    %c0_i32_1 = arith.constant 0 : i32
    return %c0_i32, %c0_i32_0 : i32, i32
  }
  func.func @transform_4(%arg0: i32) -> (i32, i32, i32) {
    %c0_i32 = arith.constant 0 : i32
    %c0_i32_0 = arith.constant 0 : i32
    %c0_i32_1 = arith.constant 0 : i32
    %c0_i32_2 = arith.constant 0 : i32
    return %c0_i32, %c0_i32_0, %c0_i32_1 : i32, i32, i32
  }
  func.func @transform_5(%arg0: i32) -> (i32, i32) {
    %c0_i32 = arith.constant 0 : i32
    %c0_i32_0 = arith.constant 0 : i32
    %c0_i32_1 = arith.constant 0 : i32
    return %c0_i32, %c0_i32_0 : i32, i32
  }
  func.func @transform_6(%arg0: i32) -> (i32, i32) {
    %c0_i32 = arith.constant 0 : i32
    %c0_i32_0 = arith.constant 0 : i32
    %c0_i32_1 = arith.constant 0 : i32
    return %c0_i32, %c0_i32_0 : i32, i32
  }
  func.func @transform_7(%arg0: i32) -> (i32, i32, i32) {
    %c0_i32 = arith.constant 0 : i32
    %c0_i32_0 = arith.constant 0 : i32
    %c0_i32_1 = arith.constant 0 : i32
    return %arg0, %c0_i32, %c0_i32_0 : i32, i32, i32
  }
}

</mosaic_0001>

<llo_original>
// kernel: tpu_custom_call.1
$region0: #{tpu_custom_call.1}
  #allocation0 [shape = 'u32[]', space=smem, size = 0x4, offset = 0x4, fixed_abs, tag = 'smem constant byte address 0x4 - core index']
  #allocation1 [shape = 'u32[144,128]{1,0:T(1,128)}', space=vmem, size = 0x12000, scoped, tag = 'internal scratch']
  #allocation2 [shape = 'f32[10,16,4]{2,1,0:T(8,128)}', space=vmem, size = 0x14000, scoped, tag = 'scratch operand']
  #allocation3 [shape = 'f32[10,16,8]{2,1,0:T(8,128)}', space=vmem, size = 0x14000, scoped, tag = 'scratch operand']
  %s0 = inlined_call_operand.hbm [shape: f32[2,8,2,8,8], index: 0, kind: input, shape index: {}]
  %s1 = inlined_call_operand.vmem [shape: bf16[9,4,8], index: 1, kind: input, shape index: {}]
  %s2 = inlined_call_operand.vmem [shape: f32[1,8], index: 2, kind: input, shape index: {}]
  %s3 = inlined_call_operand.vmem [shape: f32[1,8], index: 3, kind: input, shape index: {}]
  %s4 = inlined_call_operand.vmem [shape: bf16[9,8,8], index: 4, kind: input, shape index: {}]
  %s5 = inlined_call_operand.vmem [shape: f32[1,8], index: 5, kind: input, shape index: {}]
  %s6 = inlined_call_operand.vmem [shape: f32[1,8], index: 6, kind: input, shape index: {}]
  %s7 = inlined_call_operand.vmem [shape: f32[2,64,8], index: 7, kind: output, shape index: {}]
  %s8 = sld [smem:[#allocation0]]
  $region65: #{tpu_custom_call.1} parent=0
    _
  %s10 = ssub.s32 1, %s8
  %s11 = scalar_select 0, %s10, %s8
  $region1: #{tpu_custom_call.1} parent=0
    #allocation4 [shape = 'u8[131072]{0}', space=vmem, size = 0x20000, scoped, tag = 'input window, operand 0']
    #allocation5 [shape = 's32[2]{0}', space=sflag, size = 0x8, scoped, tag = 'scoped memory for tpu_custom_call.1']
    %12 = vsyncpa [#allocation5], 0
    %s13 = scalar_lea.sflag [#allocation5], 1
    %14 = vsyncpa %s13, 0
    loop: start=0, step=1, limit=4
    $region2: #{tpu_custom_call.1} parent=1 // loop_pre_header
      _
    $region3: #{tpu_custom_call.1} parent=1 // loop_header
      %s16 = sphi 0, %s20
      %p17 = scmp.ge.s32.totalorder %s16, 4
      %s26 = sphi 0, %s28
      %s29 = sphi 0, %s26
      %s30 = sphi 0, %s29
      %s46 = sphi 0, %s30
      %s50 = sphi 0, %s50
      %s52 = sphi 0, %s50
      %s53 = sphi 0, %s52
      %s67 = sphi 0, %s53
      %s71 = sphi 0, %s71
      %s73 = sphi 0, %s71
      %s74 = sphi 0, %s73
      %s88 = sphi 0, %s74
      %s92 = sphi 0, %s92
      %s94 = sphi 0, %s92
      %s95 = sphi 0, %s94
      %s109 = sphi 0, %s95
      %s113 = sphi 0, %s113
      %s115 = sphi 0, %s113
      %s116 = sphi 0, %s115
      %s130 = sphi 0, %s116
      %s134 = sphi 0, %s134
      %s136 = sphi 0, %s134
      %s137 = sphi 0, %s136
      %s151 = sphi 0, %s137
      %s155 = sphi 0, %s155
      %s157 = sphi 0, %s155
      %s158 = sphi 0, %s157
      %s172 = sphi 0, %s158
      %s178 = sphi 0, %s180
      %s181 = sphi 0, %s178
      %s182 = sphi 0, %s181
      %s198 = sphi 0, %s182
    $region4: #{tpu_custom_call.1} parent=1 // loop_header_branch
      %19 = sbr.rel (%p17) target = $region8
    $region5: #{tpu_custom_call.1} parent=1 // loop_body
      %s21 = ssub.s32 %s16, 1
      %s22 = ssub.s32 %s16, 2
      %s23 = sadd.s32 %s16, 1
      %s24 = ssub.s32 %s16, %s23
      %p25 = scmp.eq.s32.totalorder %s24, 0
      %s27 = sadd.s32 %s26, 1
      %s28 = scalar_select %p25, %s26, %s27
      %p31 = pneg %p25
      %p32 = scmp.eq.s32.totalorder %s16, 1
      %p33 = por %p31, %p32
      %p34 = scmp.ne.s32.totalorder %s26, %s29
      %p35 = scmp.eq.s32.totalorder %s16, 0
      %p36 = por %p34, %p35
      %p37 = scmp.ne.s32.totalorder %s26, %s29
      %p38 = scmp.eq.s32.totalorder %s21, 1
      %p39 = por %p37, %p38
      %p40 = scmp.ne.s32.totalorder %s29, %s30
      %p41 = scmp.eq.s32.totalorder %s21, 0
      %p42 = por %p40, %p41
      %p43 = scmp.ne.s32.totalorder %s29, %s30
      %p44 = scmp.eq.s32.totalorder %s22, 1
      %p45 = por %p43, %p44
      %p47 = scmp.ne.s32.totalorder %s30, %s46
      %p48 = scmp.eq.s32.totalorder %s22, 0
      %p49 = por %p47, %p48
      %s51 = sadd.s32 %s50, 1
      %p54 = scmp.eq.s32.totalorder %s16, 1
      %p55 = scmp.ne.s32.totalorder %s50, %s52
      %p56 = scmp.eq.s32.totalorder %s16, 0
      %p57 = por %p55, %p56
      %p58 = scmp.ne.s32.totalorder %s50, %s52
      %p59 = scmp.eq.s32.totalorder %s21, 1
      %p60 = por %p58, %p59
      %p61 = scmp.ne.s32.totalorder %s52, %s53
      %p62 = scmp.eq.s32.totalorder %s21, 0
      %p63 = por %p61, %p62
      %p64 = scmp.ne.s32.totalorder %s52, %s53
      %p65 = scmp.eq.s32.totalorder %s22, 1
      %p66 = por %p64, %p65
      %p68 = scmp.ne.s32.totalorder %s53, %s67
      %p69 = scmp.eq.s32.totalorder %s22, 0
      %p70 = por %p68, %p69
      %s72 = sadd.s32 %s71, 1
      %p75 = scmp.eq.s32.totalorder %s16, 1
      %p76 = scmp.ne.s32.totalorder %s71, %s73
      %p77 = scmp.eq.s32.totalorder %s16, 0
      %p78 = por %p76, %p77
      %p79 = scmp.ne.s32.totalorder %s71, %s73
      %p80 = scmp.eq.s32.totalorder %s21, 1
      %p81 = por %p79, %p80
      %p82 = scmp.ne.s32.totalorder %s73, %s74
      %p83 = scmp.eq.s32.totalorder %s21, 0
      %p84 = por %p82, %p83
      %p85 = scmp.ne.s32.totalorder %s73, %s74
      %p86 = scmp.eq.s32.totalorder %s22, 1
      %p87 = por %p85, %p86
      %p89 = scmp.ne.s32.totalorder %s74, %s88
      %p90 = scmp.eq.s32.totalorder %s22, 0
      %p91 = por %p89, %p90
      %s93 = sadd.s32 %s92, 1
      %p96 = scmp.eq.s32.totalorder %s16, 1
      %p97 = scmp.ne.s32.totalorder %s92, %s94
      %p98 = scmp.eq.s32.totalorder %s16, 0
      %p99 = por %p97, %p98
      %p100 = scmp.ne.s32.totalorder %s92, %s94
      %p101 = scmp.eq.s32.totalorder %s21, 1
      %p102 = por %p100, %p101
      %p103 = scmp.ne.s32.totalorder %s94, %s95
      %p104 = scmp.eq.s32.totalorder %s21, 0
      %p105 = por %p103, %p104
      %p106 = scmp.ne.s32.totalorder %s94, %s95
      %p107 = scmp.eq.s32.totalorder %s22, 1
      %p108 = por %p106, %p107
      %p110 = scmp.ne.s32.totalorder %s95, %s109
      %p111 = scmp.eq.s32.totalorder %s22, 0
      %p112 = por %p110, %p111
      %s114 = sadd.s32 %s113, 1
      %p117 = scmp.eq.s32.totalorder %s16, 1
      %p118 = scmp.ne.s32.totalorder %s113, %s115
      %p119 = scmp.eq.s32.totalorder %s16, 0
      %p120 = por %p118, %p119
      %p121 = scmp.ne.s32.totalorder %s113, %s115
      %p122 = scmp.eq.s32.totalorder %s21, 1
      %p123 = por %p121, %p122
      %p124 = scmp.ne.s32.totalorder %s115, %s116
      %p125 = scmp.eq.s32.totalorder %s21, 0
      %p126 = por %p124, %p125
      %p127 = scmp.ne.s32.totalorder %s115, %s116
      %p128 = scmp.eq.s32.totalorder %s22, 1
      %p129 = por %p127, %p128
      %p131 = scmp.ne.s32.totalorder %s116, %s130
      %p132 = scmp.eq.s32.totalorder %s22, 0
      %p133 = por %p131, %p132
      %s135 = sadd.s32 %s134, 1
      %p138 = scmp.eq.s32.totalorder %s16, 1
      %p139 = scmp.ne.s32.totalorder %s134, %s136
      %p140 = scmp.eq.s32.totalorder %s16, 0
      %p141 = por %p139, %p140
      %p142 = scmp.ne.s32.totalorder %s134, %s136
      %p143 = scmp.eq.s32.totalorder %s21, 1
      %p144 = por %p142, %p143
      %p145 = scmp.ne.s32.totalorder %s136, %s137
      %p146 = scmp.eq.s32.totalorder %s21, 0
      %p147 = por %p145, %p146
      %p148 = scmp.ne.s32.totalorder %s136, %s137
      %p149 = scmp.eq.s32.totalorder %s22, 1
      %p150 = por %p148, %p149
      %p152 = scmp.ne.s32.totalorder %s137, %s151
      %p153 = scmp.eq.s32.totalorder %s22, 0
      %p154 = por %p152, %p153
      %s156 = sadd.s32 %s155, 1
      %p159 = scmp.eq.s32.totalorder %s16, 1
      %p160 = scmp.ne.s32.totalorder %s155, %s157
      %p161 = scmp.eq.s32.totalorder %s16, 0
      %p162 = por %p160, %p161
      %p163 = scmp.ne.s32.totalorder %s155, %s157
      %p164 = scmp.eq.s32.totalorder %s21, 1
      %p165 = por %p163, %p164
      %p166 = scmp.ne.s32.totalorder %s157, %s158
      %p167 = scmp.eq.s32.totalorder %s21, 0
      %p168 = por %p166, %p167
      %p169 = scmp.ne.s32.totalorder %s157, %s158
      %p170 = scmp.eq.s32.totalorder %s22, 1
      %p171 = por %p169, %p170
      %p173 = scmp.ne.s32.totalorder %s158, %s172
      %p174 = scmp.eq.s32.totalorder %s22, 0
      %p175 = por %p173, %p174
      %s176 = ssub.s32 %s16, %s23
      %p177 = scmp.eq.s32.totalorder %s176, 0
      %s179 = sadd.s32 %s178, 1
      %s180 = scalar_select %p177, %s178, %s179
      %p183 = pneg %p177
      %p184 = scmp.eq.s32.totalorder %s16, 1
      %p185 = por %p183, %p184
      %p186 = scmp.ne.s32.totalorder %s178, %s181
      %p187 = scmp.eq.s32.totalorder %s16, 0
      %p188 = por %p186, %p187
      %p189 = scmp.ne.s32.totalorder %s178, %s181
      %p190 = scmp.eq.s32.totalorder %s21, 1
      %p191 = por %p189, %p190
      %p192 = scmp.ne.s32.totalorder %s181, %s182
      %p193 = scmp.eq.s32.totalorder %s21, 0
      %p194 = por %p192, %p193
      %p195 = scmp.ne.s32.totalorder %s181, %s182
      %p196 = scmp.eq.s32.totalorder %s22, 1
      %p197 = por %p195, %p196
      %p199 = scmp.ne.s32.totalorder %s182, %s198
      %p200 = scmp.eq.s32.totalorder %s22, 0
      %p201 = por %p199, %p200
      %p202 = scmp.le.s32.totalorder 1, %s16
      %p203 = scmp.lt.s32.totalorder %s16, 3
      %p204 = pnand %p202, %p203
      %p205 = pneg %p204
      // Predicated region
      $region9: #{tpu_custom_call.1} parent=5 // pred_check
        _
      $region10: #{tpu_custom_call.1} parent=5 // pred_check_branch
        %207 = sbr.rel (%p204) target = $region12
      $region11: #{tpu_custom_call.1} parent=5 // pred_region
        %s208 = ssub.s32 %s16, 1
        // Predicated region
        $region13: #{tpu_custom_call.1} parent=11 // pred_check
          %p209 = pneg %p63
        $region14: #{tpu_custom_call.1} parent=11 // pred_check_branch
          %211 = sbr.rel (%p209) target = $region16
        $region15: #{tpu_custom_call.1} parent=11 // pred_region
          _
        $region16: #{tpu_custom_call.1} parent=11 // pred_fallthru
          _
        // Predicated region
        $region17: #{tpu_custom_call.1} parent=11 // pred_check
          %p212 = pneg %p84
        $region18: #{tpu_custom_call.1} parent=11 // pred_check_branch
          %214 = sbr.rel (%p212) target = $region20
        $region19: #{tpu_custom_call.1} parent=11 // pred_region
          _
        $region20: #{tpu_custom_call.1} parent=11 // pred_fallthru
          _
        // Predicated region
        $region21: #{tpu_custom_call.1} parent=11 // pred_check
          %p215 = pneg %p105
        $region22: #{tpu_custom_call.1} parent=11 // pred_check_branch
          %217 = sbr.rel (%p215) target = $region24
        $region23: #{tpu_custom_call.1} parent=11 // pred_region
          _
        $region24: #{tpu_custom_call.1} parent=11 // pred_fallthru
          _
        // Predicated region
        $region25: #{tpu_custom_call.1} parent=11 // pred_check
          %p218 = pneg %p126
        $region26: #{tpu_custom_call.1} parent=11 // pred_check_branch
          %220 = sbr.rel (%p218) target = $region28
        $region27: #{tpu_custom_call.1} parent=11 // pred_region
          _
        $region28: #{tpu_custom_call.1} parent=11 // pred_fallthru
          _
        // Predicated region
        $region29: #{tpu_custom_call.1} parent=11 // pred_check
          %p221 = pneg %p147
        $region30: #{tpu_custom_call.1} parent=11 // pred_check_branch
          %223 = sbr.rel (%p221) target = $region32
        $region31: #{tpu_custom_call.1} parent=11 // pred_region
          _
        $region32: #{tpu_custom_call.1} parent=11 // pred_fallthru
          _
        // Predicated region
        $region33: #{tpu_custom_call.1} parent=11 // pred_check
          %p224 = pneg %p168
        $region34: #{tpu_custom_call.1} parent=11 // pred_check_branch
          %226 = sbr.rel (%p224) target = $region36
        $region35: #{tpu_custom_call.1} parent=11 // pred_region
          _
        $region36: #{tpu_custom_call.1} parent=11 // pred_fallthru
          _
      $region12: #{tpu_custom_call.1} parent=5 // pred_fallthru
        _
      %p227 = scmp.lt.s32.totalorder %s16, 2
      // Predicated region
      $region37: #{tpu_custom_call.1} parent=5 // pred_check
        %p228 = pneg %p227
      $region38: #{tpu_custom_call.1} parent=5 // pred_check_branch
        %230 = sbr.rel (%p228) target = $region40
      $region39: #{tpu_custom_call.1} parent=5 // pred_region
        // Predicated region
        $region41: #{tpu_custom_call.1} parent=39 // pred_check
          %p231 = pneg %p36
        $region42: #{tpu_custom_call.1} parent=39 // pred_check_branch
          %233 = sbr.rel (%p231) target = $region44
        $region43: #{tpu_custom_call.1} parent=39 // pred_region
          %s234 = sand.u32 %s26, 1
          %s235 = scalar_lea.sflag [#allocation5], %s234
          %s236 = sand.u32 %s26, 1
          %s237 = smul.addr %s236, 128
          %s238 = scalar_lea.vmem [#allocation4], %s237
          %s240 = ssub.s32 2048, 2048
          %241 = vsyncadd %s235, %s240
          %s242 = smul.addr %s16, 16
          %s243 = smul.addr %s242, 128
          %s244 = scalar_lea.hbm %s0, %s243
          %s245 = sshll.u32 %s238, 4
          %s246 = int_to_ptr.vmem [resolvable:$true] %s245
          %251 = dma.hbm_to_vmem [thread:$0]  %s244, 2048, %s246, %s235, 128, 128, 8
        $region44: #{tpu_custom_call.1} parent=39 // pred_fallthru
          _
      $region40: #{tpu_custom_call.1} parent=5 // pred_fallthru
        _
      %p252 = scmp.le.s32.totalorder 1, %s16
      %p253 = scmp.lt.s32.totalorder %s16, 3
      %p254 = pnand %p252, %p253
      %p255 = pneg %p254
      // Predicated region
      $region45: #{tpu_custom_call.1} parent=5 // pred_check
        _
      $region46: #{tpu_custom_call.1} parent=5 // pred_check_branch
        %257 = sbr.rel (%p254) target = $region48
      $region47: #{tpu_custom_call.1} parent=5 // pred_region
        %s258 = ssub.s32 %s16, 1
        %s259 = sand.u32 %s29, 1
        %s260 = scalar_lea.sflag [#allocation5], %s259
        %s261 = sand.u32 %s29, 1
        %s262 = smul.addr %s261, 128
        %s263 = scalar_lea.vmem [#allocation4], %s262
        // Predicated region
        $region49: #{tpu_custom_call.1} parent=47 // pred_check
          %p264 = pneg %p42
        $region50: #{tpu_custom_call.1} parent=47 // pred_check_branch
          %266 = sbr.rel (%p264) target = $region52
        $region51: #{tpu_custom_call.1} parent=47 // pred_region
          %267 = dma.done %s260, 2048
        $region52: #{tpu_custom_call.1} parent=47 // pred_fallthru
          _
        %s268 = sand.u32 %s29, 1
        %s269 = scalar_lea.sflag [#allocation5], %s268
        %s270 = sand.u32 %s29, 1
        %s271 = smul.addr %s270, 128
        %s272 = scalar_lea.vmem [#allocation4], %s271
        %p273 = pneg %p42
        %p274 = pneg %p39
        %p275 = pneg %p63
        %p276 = pneg %p60
        %p277 = pneg %p84
        %p278 = pneg %p81
        %p279 = pneg %p105
        %p280 = pneg %p102
        %p281 = pneg %p126
        %p282 = pneg %p123
        %p283 = pneg %p147
        %p284 = pneg %p144
        %p285 = pneg %p168
        %p286 = pneg %p165
        %p287 = pneg %p194
        %p288 = pneg %p191
        %p289 = scmp.lt.s32.totalorder %s21, 1
        %s290 = scalar_select %p289, %s21, 1
        %s291 = smul.addr %s290, 8
        %s292 = smul.addr %s291, 8
        %s293 = scalar_lea.vmem %s7, %s292
        %p294 = scmp.lt.s32.totalorder %s21, 1
        %s295 = scalar_select %p294, %s21, 1
        %s296 = smul.addr %s295, 8
        %s297 = smul.addr %s296, 8
        %s298 = scalar_lea.vmem %s7, %s297
        %v300 = vld [vmem:[%s263] sm:$0xff]
        %v301 = vld [vmem:[%s263 + $0x8] sm:$0xff]
        %v302 = vld [vmem:[%s263 + $0x10] sm:$0xff]
        %v303 = vld [vmem:[%s263 + $0x18] sm:$0xff]
        %v304 = vld [vmem:[%s263 + $0x20] sm:$0xff]
        %v305 = vld [vmem:[%s263 + $0x28] sm:$0xff]
        %v306 = vld [vmem:[%s263 + $0x30] sm:$0xff]
        %v307 = vld [vmem:[%s263 + $0x38] sm:$0xff]
        %v308 = vld [vmem:[%s263 + $0x40] sm:$0xff]
        %v309 = vld [vmem:[%s263 + $0x48] sm:$0xff]
        %v310 = vld [vmem:[%s263 + $0x50] sm:$0xff]
        %v311 = vld [vmem:[%s263 + $0x58] sm:$0xff]
        %v312 = vld [vmem:[%s263 + $0x60] sm:$0xff]
        %v313 = vld [vmem:[%s263 + $0x68] sm:$0xff]
        %v314 = vld [vmem:[%s263 + $0x70] sm:$0xff]
        %v315 = vld [vmem:[%s263 + $0x78] sm:$0xff]
        %v316 = vmax.f32 %v300, %v301
        %v317 = vmax.f32 %v302, %v303
        %v318 = vmax.f32 %v304, %v305
        %v319 = vmax.f32 %v306, %v307
        %v320 = vmax.f32 %v308, %v309
        %v321 = vmax.f32 %v310, %v311
        %v322 = vmax.f32 %v312, %v313
        %v323 = vmax.f32 %v314, %v315
        %332 = vrot.lane.b32.xlu0 %v316, 124
        %v333 = vpop.permute.xlu0 %332
        %334 = vrot.lane.b32.xlu0 %v317, 124
        %v335 = vpop.permute.xlu0 %334
        %336 = vrot.lane.b32.xlu0 %v318, 124
        %v337 = vpop.permute.xlu0 %336
        %338 = vrot.lane.b32.xlu0 %v319, 124
        %v339 = vpop.permute.xlu0 %338
        %340 = vrot.lane.b32.xlu0 %v320, 124
        %v341 = vpop.permute.xlu0 %340
        %342 = vrot.lane.b32.xlu0 %v321, 124
        %v343 = vpop.permute.xlu0 %342
        %344 = vrot.lane.b32.xlu0 %v322, 124
        %v345 = vpop.permute.xlu0 %344
        %346 = vrot.lane.b32.xlu0 %v323, 124
        %v347 = vpop.permute.xlu0 %346
        %v356 = vmax.f32 %v316, %v333
        %v357 = vmax.f32 %v317, %v335
        %v358 = vmax.f32 %v318, %v337
        %v359 = vmax.f32 %v319, %v339
        %v360 = vmax.f32 %v320, %v341
        %v361 = vmax.f32 %v321, %v343
        %v362 = vmax.f32 %v322, %v345
        %v363 = vmax.f32 %v323, %v347
        %vm364 = vcmask 31744
        %365 = vst.msk [vmem:[#allocation2] sm:$0xff] %vm364, 0.0
        %366 = vst.msk [vmem:[#allocation2 + $0x8] sm:$0xff] %vm364, 0.0
        %s367 = scalar_lea.vmem [#allocation2], 144
        %368 = vst.msk [vmem:[%s367] sm:$0xff] %vm364, 0.0
        %369 = vst.msk [vmem:[%s367 + $0x8] sm:$0xff] %vm364, 0.0
        %s370 = scalar_lea.vmem [#allocation2], 16
        %vm371 = vcmask 24576
        %372 = vst.msk [vmem:[%s370] sm:$0x1] %vm371, 0.0
        %373 = vst.msk [vmem:[%s370 + $0x10] sm:$0x1] %vm371, 0.0
        %374 = vst.msk [vmem:[%s370 + $0x20] sm:$0x1] %vm371, 0.0
        %375 = vst.msk [vmem:[%s370 + $0x30] sm:$0x1] %vm371, 0.0
        %376 = vst.msk [vmem:[%s370 + $0x40] sm:$0x1] %vm371, 0.0
        %377 = vst.msk [vmem:[%s370 + $0x50] sm:$0x1] %vm371, 0.0
        %378 = vst.msk [vmem:[%s370 + $0x60] sm:$0x1] %vm371, 0.0
        %379 = vst.msk [vmem:[%s370 + $0x70] sm:$0x1] %vm371, 0.0
        %380 = vst.msk [vmem:[%s370 + $0x9] sm:$0x1] %vm371, 0.0
        %381 = vst.msk [vmem:[%s370 + $0x19] sm:$0x1] %vm371, 0.0
        %382 = vst.msk [vmem:[%s370 + $0x29] sm:$0x1] %vm371, 0.0
        %383 = vst.msk [vmem:[%s370 + $0x39] sm:$0x1] %vm371, 0.0
        %384 = vst.msk [vmem:[%s370 + $0x49] sm:$0x1] %vm371, 0.0
        %385 = vst.msk [vmem:[%s370 + $0x59] sm:$0x1] %vm371, 0.0
        %386 = vst.msk [vmem:[%s370 + $0x69] sm:$0x1] %vm371, 0.0
        %387 = vst.msk [vmem:[%s370 + $0x79] sm:$0x1] %vm371, 0.0
        %388 = vst.msk [vmem:[%s370 + $0x1] sm:$0xff] %vm364, %v356
        %389 = vst.msk [vmem:[%s370 + $0x11] sm:$0xff] %vm364, %v357
        %390 = vst.msk [vmem:[%s370 + $0x21] sm:$0xff] %vm364, %v358
        %391 = vst.msk [vmem:[%s370 + $0x31] sm:$0xff] %vm364, %v359
        %392 = vst.msk [vmem:[%s370 + $0x41] sm:$0xff] %vm364, %v360
        %393 = vst.msk [vmem:[%s370 + $0x51] sm:$0xff] %vm364, %v361
        %394 = vst.msk [vmem:[%s370 + $0x61] sm:$0xff] %vm364, %v362
        %395 = vst.msk [vmem:[%s370 + $0x71] sm:$0xff] %vm364, %v363
        %v396 = vld [vmem:[#allocation2] sm:$0xff]
        %v397 = vld [vmem:[#allocation2 + $0x10] sm:$0xff]
        %v398 = vld [vmem:[#allocation2 + $0x20] sm:$0xff]
        %v399 = vld [vmem:[#allocation2 + $0x30] sm:$0xff]
        %v400 = vld [vmem:[#allocation2 + $0x40] sm:$0xff]
        %v401 = vld [vmem:[#allocation2 + $0x50] sm:$0xff]
        %v402 = vld [vmem:[#allocation2 + $0x60] sm:$0xff]
        %v403 = vld [vmem:[#allocation2 + $0x70] sm:$0xff]
        %v404 = vld [vmem:[#allocation2 + $0x1] sm:$0xff]
        %v405 = vld [vmem:[#allocation2 + $0x11] sm:$0xff]
        %v406 = vld [vmem:[#allocation2 + $0x21] sm:$0xff]
        %v407 = vld [vmem:[#allocation2 + $0x31] sm:$0xff]
        %v408 = vld [vmem:[#allocation2 + $0x41] sm:$0xff]
        %v409 = vld [vmem:[#allocation2 + $0x51] sm:$0xff]
        %v410 = vld [vmem:[#allocation2 + $0x61] sm:$0xff]
        %v411 = vld [vmem:[#allocation2 + $0x71] sm:$0xff]
        %v412 = vld [vmem:[#allocation2 + $0x2] sm:$0xff]
        %v413 = vld [vmem:[#allocation2 + $0x12] sm:$0xff]
        %v414 = vld [vmem:[#allocation2 + $0x22] sm:$0xff]
        %v415 = vld [vmem:[#allocation2 + $0x32] sm:$0xff]
        %v416 = vld [vmem:[#allocation2 + $0x42] sm:$0xff]
        %v417 = vld [vmem:[#allocation2 + $0x52] sm:$0xff]
        %v418 = vld [vmem:[#allocation2 + $0x62] sm:$0xff]
        %v419 = vld [vmem:[#allocation2 + $0x72] sm:$0xff]
        %v420 = vld [vmem:[%s370] sm:$0xff]
        %v421 = vld [vmem:[%s370 + $0x10] sm:$0xff]
        %v422 = vld [vmem:[%s370 + $0x20] sm:$0xff]
        %v423 = vld [vmem:[%s370 + $0x30] sm:$0xff]
        %v424 = vld [vmem:[%s370 + $0x40] sm:$0xff]
        %v425 = vld [vmem:[%s370 + $0x50] sm:$0xff]
        %v426 = vld [vmem:[%s370 + $0x60] sm:$0xff]
        %v427 = vld [vmem:[%s370 + $0x70] sm:$0xff]
        %v428 = vld [vmem:[%s370 + $0x1] sm:$0xff]
        %v429 = vld [vmem:[%s370 + $0x11] sm:$0xff]
        %v430 = vld [vmem:[%s370 + $0x21] sm:$0xff]
        %v431 = vld [vmem:[%s370 + $0x31] sm:$0xff]
        %v432 = vld [vmem:[%s370 + $0x41] sm:$0xff]
        %v433 = vld [vmem:[%s370 + $0x51] sm:$0xff]
        %v434 = vld [vmem:[%s370 + $0x61] sm:$0xff]
        %v435 = vld [vmem:[%s370 + $0x71] sm:$0xff]
        %v436 = vld [vmem:[%s370 + $0x2] sm:$0xff]
        %v437 = vld [vmem:[%s370 + $0x12] sm:$0xff]
        %v438 = vld [vmem:[%s370 + $0x22] sm:$0xff]
        %v439 = vld [vmem:[%s370 + $0x32] sm:$0xff]
        %v440 = vld [vmem:[%s370 + $0x42] sm:$0xff]
        %v441 = vld [vmem:[%s370 + $0x52] sm:$0xff]
        %v442 = vld [vmem:[%s370 + $0x62] sm:$0xff]
        %v443 = vld [vmem:[%s370 + $0x72] sm:$0xff]
        %s444 = scalar_lea.vmem [#allocation2], 32
        %v445 = vld [vmem:[%s444] sm:$0xff]
        %v446 = vld [vmem:[%s444 + $0x10] sm:$0xff]
        %v447 = vld [vmem:[%s444 + $0x20] sm:$0xff]
        %v448 = vld [vmem:[%s444 + $0x30] sm:$0xff]
        %v449 = vld [vmem:[%s444 + $0x40] sm:$0xff]
        %v450 = vld [vmem:[%s444 + $0x50] sm:$0xff]
        %v451 = vld [vmem:[%s444 + $0x60] sm:$0xff]
        %v452 = vld [vmem:[%s444 + $0x70] sm:$0xff]
        %v453 = vld [vmem:[%s444 + $0x1] sm:$0xff]
        %v454 = vld [vmem:[%s444 + $0x11] sm:$0xff]
        %v455 = vld [vmem:[%s444 + $0x21] sm:$0xff]
        %v456 = vld [vmem:[%s444 + $0x31] sm:$0xff]
        %v457 = vld [vmem:[%s444 + $0x41] sm:$0xff]
        %v458 = vld [vmem:[%s444 + $0x51] sm:$0xff]
        %v459 = vld [vmem:[%s444 + $0x61] sm:$0xff]
        %v460 = vld [vmem:[%s444 + $0x71] sm:$0xff]
        %v461 = vld [vmem:[%s444 + $0x2] sm:$0xff]
        %v462 = vld [vmem:[%s444 + $0x12] sm:$0xff]
        %v463 = vld [vmem:[%s444 + $0x22] sm:$0xff]
        %v464 = vld [vmem:[%s444 + $0x32] sm:$0xff]
        %v465 = vld [vmem:[%s444 + $0x42] sm:$0xff]
        %v466 = vld [vmem:[%s444 + $0x52] sm:$0xff]
        %v467 = vld [vmem:[%s444 + $0x62] sm:$0xff]
        %v468 = vld [vmem:[%s444 + $0x72] sm:$0xff]
        %477 = vrot.lane.b32.xlu0 %v404, 4
        %v478 = vpop.permute.xlu0 %477
        %479 = vrot.lane.b32.xlu0 %v405, 4
        %v480 = vpop.permute.xlu0 %479
        %481 = vrot.lane.b32.xlu0 %v406, 4
        %v482 = vpop.permute.xlu0 %481
        %483 = vrot.lane.b32.xlu0 %v407, 4
        %v484 = vpop.permute.xlu0 %483
        %485 = vrot.lane.b32.xlu0 %v408, 4
        %v486 = vpop.permute.xlu0 %485
        %487 = vrot.lane.b32.xlu0 %v409, 4
        %v488 = vpop.permute.xlu0 %487
        %489 = vrot.lane.b32.xlu0 %v410, 4
        %v490 = vpop.permute.xlu0 %489
        %491 = vrot.lane.b32.xlu0 %v411, 4
        %v492 = vpop.permute.xlu0 %491
        %509 = vrot.lane.b32.xlu0 %v412, 8
        %v510 = vpop.permute.xlu0 %509
        %511 = vrot.lane.b32.xlu0 %v413, 8
        %v512 = vpop.permute.xlu0 %511
        %513 = vrot.lane.b32.xlu0 %v414, 8
        %v514 = vpop.permute.xlu0 %513
        %515 = vrot.lane.b32.xlu0 %v415, 8
        %v516 = vpop.permute.xlu0 %515
        %517 = vrot.lane.b32.xlu0 %v416, 8
        %v518 = vpop.permute.xlu0 %517
        %519 = vrot.lane.b32.xlu0 %v417, 8
        %v520 = vpop.permute.xlu0 %519
        %521 = vrot.lane.b32.xlu0 %v418, 8
        %v522 = vpop.permute.xlu0 %521
        %523 = vrot.lane.b32.xlu0 %v419, 8
        %v524 = vpop.permute.xlu0 %523
        %541 = vrot.lane.b32.xlu0 %v420, 12
        %v542 = vpop.permute.xlu0 %541
        %543 = vrot.lane.b32.xlu0 %v421, 12
        %v544 = vpop.permute.xlu0 %543
        %545 = vrot.lane.b32.xlu0 %v422, 12
        %v546 = vpop.permute.xlu0 %545
        %547 = vrot.lane.b32.xlu0 %v423, 12
        %v548 = vpop.permute.xlu0 %547
        %549 = vrot.lane.b32.xlu0 %v424, 12
        %v550 = vpop.permute.xlu0 %549
        %551 = vrot.lane.b32.xlu0 %v425, 12
        %v552 = vpop.permute.xlu0 %551
        %553 = vrot.lane.b32.xlu0 %v426, 12
        %v554 = vpop.permute.xlu0 %553
        %555 = vrot.lane.b32.xlu0 %v427, 12
        %v556 = vpop.permute.xlu0 %555
        %573 = vrot.lane.b32.xlu0 %v428, 16
        %v574 = vpop.permute.xlu0 %573
        %575 = vrot.lane.b32.xlu0 %v429, 16
        %v576 = vpop.permute.xlu0 %575
        %577 = vrot.lane.b32.xlu0 %v430, 16
        %v578 = vpop.permute.xlu0 %577
        %579 = vrot.lane.b32.xlu0 %v431, 16
        %v580 = vpop.permute.xlu0 %579
        %581 = vrot.lane.b32.xlu0 %v432, 16
        %v582 = vpop.permute.xlu0 %581
        %583 = vrot.lane.b32.xlu0 %v433, 16
        %v584 = vpop.permute.xlu0 %583
        %585 = vrot.lane.b32.xlu0 %v434, 16
        %v586 = vpop.permute.xlu0 %585
        %587 = vrot.lane.b32.xlu0 %v435, 16
        %v588 = vpop.permute.xlu0 %587
        %605 = vrot.lane.b32.xlu0 %v436, 20
        %v606 = vpop.permute.xlu0 %605
        %607 = vrot.lane.b32.xlu0 %v437, 20
        %v608 = vpop.permute.xlu0 %607
        %609 = vrot.lane.b32.xlu0 %v438, 20
        %v610 = vpop.permute.xlu0 %609
        %611 = vrot.lane.b32.xlu0 %v439, 20
        %v612 = vpop.permute.xlu0 %611
        %613 = vrot.lane.b32.xlu0 %v440, 20
        %v614 = vpop.permute.xlu0 %613
        %615 = vrot.lane.b32.xlu0 %v441, 20
        %v616 = vpop.permute.xlu0 %615
        %617 = vrot.lane.b32.xlu0 %v442, 20
        %v618 = vpop.permute.xlu0 %617
        %619 = vrot.lane.b32.xlu0 %v443, 20
        %v620 = vpop.permute.xlu0 %619
        %637 = vrot.lane.b32.xlu0 %v445, 24
        %v638 = vpop.permute.xlu0 %637
        %639 = vrot.lane.b32.xlu0 %v446, 24
        %v640 = vpop.permute.xlu0 %639
        %641 = vrot.lane.b32.xlu0 %v447, 24
        %v642 = vpop.permute.xlu0 %641
        %643 = vrot.lane.b32.xlu0 %v448, 24
        %v644 = vpop.permute.xlu0 %643
        %645 = vrot.lane.b32.xlu0 %v449, 24
        %v646 = vpop.permute.xlu0 %645
        %647 = vrot.lane.b32.xlu0 %v450, 24
        %v648 = vpop.permute.xlu0 %647
        %649 = vrot.lane.b32.xlu0 %v451, 24
        %v650 = vpop.permute.xlu0 %649
        %651 = vrot.lane.b32.xlu0 %v452, 24
        %v652 = vpop.permute.xlu0 %651
        %669 = vrot.lane.b32.xlu0 %v453, 28
        %v670 = vpop.permute.xlu0 %669
        %671 = vrot.lane.b32.xlu0 %v454, 28
        %v672 = vpop.permute.xlu0 %671
        %673 = vrot.lane.b32.xlu0 %v455, 28
        %v674 = vpop.permute.xlu0 %673
        %675 = vrot.lane.b32.xlu0 %v456, 28
        %v676 = vpop.permute.xlu0 %675
        %677 = vrot.lane.b32.xlu0 %v457, 28
        %v678 = vpop.permute.xlu0 %677
        %679 = vrot.lane.b32.xlu0 %v458, 28
        %v680 = vpop.permute.xlu0 %679
        %681 = vrot.lane.b32.xlu0 %v459, 28
        %v682 = vpop.permute.xlu0 %681
        %683 = vrot.lane.b32.xlu0 %v460, 28
        %v684 = vpop.permute.xlu0 %683
        %701 = vrot.lane.b32.xlu0 %v461, 32
        %v702 = vpop.permute.xlu0 %701
        %703 = vrot.lane.b32.xlu0 %v462, 32
        %v704 = vpop.permute.xlu0 %703
        %705 = vrot.lane.b32.xlu0 %v463, 32
        %v706 = vpop.permute.xlu0 %705
        %707 = vrot.lane.b32.xlu0 %v464, 32
        %v708 = vpop.permute.xlu0 %707
        %709 = vrot.lane.b32.xlu0 %v465, 32
        %v710 = vpop.permute.xlu0 %709
        %711 = vrot.lane.b32.xlu0 %v466, 32
        %v712 = vpop.permute.xlu0 %711
        %713 = vrot.lane.b32.xlu0 %v467, 32
        %v714 = vpop.permute.xlu0 %713
        %715 = vrot.lane.b32.xlu0 %v468, 32
        %v716 = vpop.permute.xlu0 %715
        %v725 = vsel %vm364, %v396, %v478
        %v726 = vsel %vm364, %v397, %v480
        %v727 = vsel %vm364, %v398, %v482
        %v728 = vsel %vm364, %v399, %v484
        %v729 = vsel %vm364, %v400, %v486
        %v730 = vsel %vm364, %v401, %v488
        %v731 = vsel %vm364, %v402, %v490
        %v732 = vsel %vm364, %v403, %v492
        %vm733 = vcmask 64512
        %v734 = vsel %vm733, %v725, %v510
        %v735 = vsel %vm733, %v726, %v512
        %v736 = vsel %vm733, %v727, %v514
        %v737 = vsel %vm733, %v728, %v516
        %v738 = vsel %vm733, %v729, %v518
        %v739 = vsel %vm733, %v730, %v520
        %v740 = vsel %vm733, %v731, %v522
        %v741 = vsel %vm733, %v732, %v524
        %vm742 = vcmask 97280
        %v743 = vsel %vm742, %v734, %v542
        %v744 = vsel %vm742, %v735, %v544
        %v745 = vsel %vm742, %v736, %v546
        %v746 = vsel %vm742, %v737, %v548
        %v747 = vsel %vm742, %v738, %v550
        %v748 = vsel %vm742, %v739, %v552
        %v749 = vsel %vm742, %v740, %v554
        %v750 = vsel %vm742, %v741, %v556
        %vm751 = vcmask 130048
        %v752 = vsel %vm751, %v743, %v574
        %v753 = vsel %vm751, %v744, %v576
        %v754 = vsel %vm751, %v745, %v578
        %v755 = vsel %vm751, %v746, %v580
        %v756 = vsel %vm751, %v747, %v582
        %v757 = vsel %vm751, %v748, %v584
        %v758 = vsel %vm751, %v749, %v586
        %v759 = vsel %vm751, %v750, %v588
        %vm760 = vcmask 162816
        %v761 = vsel %vm760, %v752, %v606
        %v762 = vsel %vm760, %v753, %v608
        %v763 = vsel %vm760, %v754, %v610
        %v764 = vsel %vm760, %v755, %v612
        %v765 = vsel %vm760, %v756, %v614
        %v766 = vsel %vm760, %v757, %v616
        %v767 = vsel %vm760, %v758, %v618
        %v768 = vsel %vm760, %v759, %v620
        %vm769 = vcmask 195584
        %v770 = vsel %vm769, %v761, %v638
        %v771 = vsel %vm769, %v762, %v640
        %v772 = vsel %vm769, %v763, %v642
        %v773 = vsel %vm769, %v764, %v644
        %v774 = vsel %vm769, %v765, %v646
        %v775 = vsel %vm769, %v766, %v648
        %v776 = vsel %vm769, %v767, %v650
        %v777 = vsel %vm769, %v768, %v652
        %vm778 = vcmask 228352
        %v779 = vsel %vm778, %v770, %v670
        %v780 = vsel %vm778, %v771, %v672
        %v781 = vsel %vm778, %v772, %v674
        %v782 = vsel %vm778, %v773, %v676
        %v783 = vsel %vm778, %v774, %v678
        %v784 = vsel %vm778, %v775, %v680
        %v785 = vsel %vm778, %v776, %v682
        %v786 = vsel %vm778, %v777, %v684
        %vm787 = vcmask 261120
        %v788 = vsel %vm787, %v779, %v702
        %v789 = vsel %vm787, %v780, %v704
        %v790 = vsel %vm787, %v781, %v706
        %v791 = vsel %vm787, %v782, %v708
        %v792 = vsel %vm787, %v783, %v710
        %v793 = vsel %vm787, %v784, %v712
        %v794 = vsel %vm787, %v785, %v714
        %v795 = vsel %vm787, %v786, %v716
        %v796 = vpack.c.bf16 %v789, %v788
        %v797 = vpack.c.bf16 %v791, %v790
        %v798 = vpack.c.bf16 %v793, %v792
        %v799 = vpack.c.bf16 %v795, %v794
        %v800 = vld [vmem:[%s1] sm:$0x3]
        %v801 = vld [vmem:[%s1 + $0x2] sm:$0x3]
        %v802 = vld [vmem:[%s1 + $0x4] sm:$0x3]
        %v803 = vld [vmem:[%s1 + $0x6] sm:$0x3]
        %v804 = vld [vmem:[%s1 + $0x8] sm:$0x3]
        %v805 = vld [vmem:[%s1 + $0xa] sm:$0x3]
        %v806 = vld [vmem:[%s1 + $0xc] sm:$0x3]
        %v807 = vld [vmem:[%s1 + $0xe] sm:$0x3]
        %v808 = vld [vmem:[%s1 + $0x10] sm:$0x3]
        %v818 = vcombine.low %v800, %v801
        %v819 = vcombine.low %v802, %v803
        %v821 = vunpack.c.l.s4 1983009808
        %v822 = vunpack.c.0.s8 %v821
        %v823 = vlaneseq
        %v824 = vshrl.u32 %v823, 7
        %v825 = vsub.s32 %v822, %v824
        %v826 = vrot.slane %v818, %v825
        %v828 = vunpack.c.l.s4 1983009808
        %v829 = vunpack.c.0.s8 %v828
        %v830 = vlaneseq
        %v831 = vshrl.u32 %v830, 7
        %v832 = vsub.s32 %v829, %v831
        %v833 = vrot.slane %v819, %v832
        %v834 = vcombine.low %v826, %v833
        %v835 = vcombine.low %v804, %v805
        %v836 = vcombine.low %v806, %v807
        %v838 = vunpack.c.l.s4 1983009808
        %v839 = vunpack.c.0.s8 %v838
        %v840 = vlaneseq
        %v841 = vshrl.u32 %v840, 7
        %v842 = vsub.s32 %v839, %v841
        %v843 = vrot.slane %v835, %v842
        %v845 = vunpack.c.l.s4 1983009808
        %v846 = vunpack.c.0.s8 %v845
        %v847 = vlaneseq
        %v848 = vshrl.u32 %v847, 7
        %v849 = vsub.s32 %v846, %v848
        %v850 = vrot.slane %v836, %v849
        %v851 = vcombine.low %v843, %v850
        %v853 = vunpack.c.l.s4 1983009808
        %v854 = vunpack.c.0.s8 %v853
        %v855 = vlaneseq
        %v856 = vshrl.u32 %v855, 7
        %v857 = vsub.s32 %v854, %v856
        %v858 = vrot.slane %v808, %v857
        %vm861 = vcmask 293888
        %v863 = vsel %vm861, %v796, 0
        %v866 = vsel %vm861, %v797, 0
        %v869 = vsel %vm861, %v798, 0
        %v872 = vsel %vm861, %v799, 0
        %vm874 = vcmask 1041408
        %v876 = vsel %vm874, %v858, 0
        %878 = vmatprep.subr.bf16.mxu0 0
        %879 = vmatpush1.bf16.msra.mxu0 %v834
        %880 = vmatprep.subr.bf16.mxu0 0
        %881 = vmatpush1.bf16.msra.mxu0 %v851
        %882 = vmatprep.subr.bf16.mxu0 0
        %883 = vmatpush1.bf16.msra.mxu0 %v876
        %884 = vmatprep.subr.bf16.mxu0 0
        %885 = vmatpush1.bf16.msra.mxu0 0
        %886 = vmatprep.subr.bf16.mxu0 0
        %887 = vmatpush1.bf16.msra.mxu0 0
        %888 = vmatprep.subr.bf16.mxu0 0
        %889 = vmatpush1.bf16.msra.mxu0 0
        %890 = vmatprep.subr.bf16.mxu0 0
        %891 = vmatpush1.bf16.msra.mxu0 0
        %892 = vmatprep.subr.bf16.mxu0 0
        %893 = vmatpush1.bf16.msra.mxu0 0
        %894 = vmatprep.subr.bf16.mxu0 0
        %895 = vmatpush1.bf16.msra.mxu0 0
        %896 = vmatprep.subr.bf16.mxu0 0
        %897 = vmatpush1.bf16.msra.mxu0 0
        %898 = vmatprep.subr.bf16.mxu0 0
        %899 = vmatpush1.bf16.msra.mxu0 0
        %900 = vmatprep.subr.bf16.mxu0 0
        %901 = vmatpush1.bf16.msra.mxu0 0
        %902 = vmatprep.subr.bf16.mxu0 0
        %903 = vmatpush1.bf16.msra.mxu0 0
        %904 = vmatprep.subr.bf16.mxu0 0
        %905 = vmatpush1.bf16.msra.mxu0 0
        %906 = vmatprep.subr.bf16.mxu0 0
        %907 = vmatpush1.bf16.msra.mxu0 0
        %908 = vmatprep.subr.bf16.mxu0 0
        %909 = vmatpush1.bf16.msra.mxu0 0
        %910 = vmatprep.mubr.bf16.mxu0 0
        %911 = vmatmul.mubr.bf16.gmra.mrb[0].mxu0 %v863
        %v912 = vpop.f32.mrb[0].mxu0
        %v913 = vadd.f32 0.0, %v912
        %v914 = vpop.f32.mrb[0].mxu0
        %v915 = vpop.f32.mrb[0].mxu0
        %v916 = vadd.f32 0.0, %v915
        %v917 = vpop.f32.mrb[0].mxu0
        %918 = vmatprep.mubr.bf16.mxu0 0
        %919 = vmatmul.mubr.bf16.gmra.mrb[0].mxu0 %v866
        %v920 = vpop.f32.mrb[0].mxu0
        %v921 = vadd.f32 0.0, %v920
        %v922 = vpop.f32.mrb[0].mxu0
        %v923 = vpop.f32.mrb[0].mxu0
        %v924 = vadd.f32 0.0, %v923
        %v925 = vpop.f32.mrb[0].mxu0
        %926 = vmatprep.mubr.bf16.mxu0 0
        %927 = vmatmul.mubr.bf16.gmra.mrb[0].mxu0 %v869
        %v928 = vpop.f32.mrb[0].mxu0
        %v929 = vadd.f32 0.0, %v928
        %v930 = vpop.f32.mrb[0].mxu0
        %v931 = vpop.f32.mrb[0].mxu0
        %v932 = vadd.f32 0.0, %v931
        %v933 = vpop.f32.mrb[0].mxu0
        %934 = vmatprep.mubr.bf16.mxu0 0
        %935 = vmatmul.mubr.bf16.gmra.mrb[0].mxu0 %v872
        %v936 = vpop.f32.mrb[0].mxu0
        %v937 = vadd.f32 0.0, %v936
        %v938 = vpop.f32.mrb[0].mxu0
        %v939 = vpop.f32.mrb[0].mxu0
        %v940 = vadd.f32 0.0, %v939
        %v941 = vpop.f32.mrb[0].mxu0
        %942 = vdwg.mxu0
        %v943 = vld [vmem:[%s2] sm:$0x1]
        %v945 = vlaneseq
        %v946 = vshrl.u32 %v945, 7
        %v947 = vsub.s32 0, %v946
        %v948 = vrot.slane %v943, %v947
        %v950 = vmul.f32 %v913, %v948
        %v951 = vmul.f32 %v916, %v948
        %v952 = vmul.f32 %v921, %v948
        %v953 = vmul.f32 %v924, %v948
        %v954 = vmul.f32 %v929, %v948
        %v955 = vmul.f32 %v932, %v948
        %v956 = vmul.f32 %v937, %v948
        %v957 = vmul.f32 %v940, %v948
        %v958 = vld [vmem:[%s3] sm:$0x1]
        %v960 = vlaneseq
        %v961 = vshrl.u32 %v960, 7
        %v962 = vsub.s32 0, %v961
        %v963 = vrot.slane %v958, %v962
        %v965 = vadd.f32 %v950, %v963
        %v966 = vadd.f32 %v951, %v963
        %v967 = vadd.f32 %v952, %v963
        %v968 = vadd.f32 %v953, %v963
        %v969 = vadd.f32 %v954, %v963
        %v970 = vadd.f32 %v955, %v963
        %v971 = vadd.f32 %v956, %v963
        %v972 = vadd.f32 %v957, %v963
        %v973 = vmax.f32 %v965, 0.0
        %v974 = vmax.f32 %v966, 0.0
        %v975 = vmax.f32 %v967, 0.0
        %v976 = vmax.f32 %v968, 0.0
        %v977 = vmax.f32 %v969, 0.0
        %v978 = vmax.f32 %v970, 0.0
        %v979 = vmax.f32 %v971, 0.0
        %v980 = vmax.f32 %v972, 0.0
        %981 = vst.msk [vmem:[#allocation3] sm:$0xff] %vm733, 0.0
        %982 = vst.msk [vmem:[#allocation3 + $0x8] sm:$0xff] %vm733, 0.0
        %s983 = scalar_lea.vmem [#allocation3], 144
        %984 = vst.msk [vmem:[%s983] sm:$0xff] %vm733, 0.0
        %985 = vst.msk [vmem:[%s983 + $0x8] sm:$0xff] %vm733, 0.0
        %s986 = scalar_lea.vmem [#allocation3], 16
        %vm987 = vcmask 57344
        %988 = vst.msk [vmem:[%s986] sm:$0x1] %vm987, 0.0
        %989 = vst.msk [vmem:[%s986 + $0x10] sm:$0x1] %vm987, 0.0
        %990 = vst.msk [vmem:[%s986 + $0x20] sm:$0x1] %vm987, 0.0
        %991 = vst.msk [vmem:[%s986 + $0x30] sm:$0x1] %vm987, 0.0
        %992 = vst.msk [vmem:[%s986 + $0x40] sm:$0x1] %vm987, 0.0
        %993 = vst.msk [vmem:[%s986 + $0x50] sm:$0x1] %vm987, 0.0
        %994 = vst.msk [vmem:[%s986 + $0x60] sm:$0x1] %vm987, 0.0
        %995 = vst.msk [vmem:[%s986 + $0x70] sm:$0x1] %vm987, 0.0
        %996 = vst.msk [vmem:[%s986 + $0x9] sm:$0x1] %vm987, 0.0
        %997 = vst.msk [vmem:[%s986 + $0x19] sm:$0x1] %vm987, 0.0
        %998 = vst.msk [vmem:[%s986 + $0x29] sm:$0x1] %vm987, 0.0
        %999 = vst.msk [vmem:[%s986 + $0x39] sm:$0x1] %vm987, 0.0
        %1000 = vst.msk [vmem:[%s986 + $0x49] sm:$0x1] %vm987, 0.0
        %1001 = vst.msk [vmem:[%s986 + $0x59] sm:$0x1] %vm987, 0.0
        %1002 = vst.msk [vmem:[%s986 + $0x69] sm:$0x1] %vm987, 0.0
        %1003 = vst.msk [vmem:[%s986 + $0x79] sm:$0x1] %vm987, 0.0
        %1004 = vst.msk [vmem:[%s986 + $0x1] sm:$0xff] %vm733, %v973
        %1005 = vst.msk [vmem:[%s986 + $0x11] sm:$0xff] %vm733, %v974
        %1006 = vst.msk [vmem:[%s986 + $0x21] sm:$0xff] %vm733, %v975
        %1007 = vst.msk [vmem:[%s986 + $0x31] sm:$0xff] %vm733, %v976
        %1008 = vst.msk [vmem:[%s986 + $0x41] sm:$0xff] %vm733, %v977
        %1009 = vst.msk [vmem:[%s986 + $0x51] sm:$0xff] %vm733, %v978
        %1010 = vst.msk [vmem:[%s986 + $0x61] sm:$0xff] %vm733, %v979
        %1011 = vst.msk [vmem:[%s986 + $0x71] sm:$0xff] %vm733, %v980
        %v1012 = vld [vmem:[#allocation3] sm:$0xff]
        %v1013 = vld [vmem:[#allocation3 + $0x10] sm:$0xff]
        %v1014 = vld [vmem:[#allocation3 + $0x20] sm:$0xff]
        %v1015 = vld [vmem:[#allocation3 + $0x30] sm:$0xff]
        %v1016 = vld [vmem:[#allocation3 + $0x40] sm:$0xff]
        %v1017 = vld [vmem:[#allocation3 + $0x50] sm:$0xff]
        %v1018 = vld [vmem:[#allocation3 + $0x60] sm:$0xff]
        %v1019 = vld [vmem:[#allocation3 + $0x70] sm:$0xff]
        %v1020 = vld [vmem:[#allocation3 + $0x1] sm:$0xff]
        %v1021 = vld [vmem:[#allocation3 + $0x11] sm:$0xff]
        %v1022 = vld [vmem:[#allocation3 + $0x21] sm:$0xff]
        %v1023 = vld [vmem:[#allocation3 + $0x31] sm:$0xff]
        %v1024 = vld [vmem:[#allocation3 + $0x41] sm:$0xff]
        %v1025 = vld [vmem:[#allocation3 + $0x51] sm:$0xff]
        %v1026 = vld [vmem:[#allocation3 + $0x61] sm:$0xff]
        %v1027 = vld [vmem:[#allocation3 + $0x71] sm:$0xff]
        %v1028 = vld [vmem:[#allocation3 + $0x2] sm:$0xff]
        %v1029 = vld [vmem:[#allocation3 + $0x12] sm:$0xff]
        %v1030 = vld [vmem:[#allocation3 + $0x22] sm:$0xff]
        %v1031 = vld [vmem:[#allocation3 + $0x32] sm:$0xff]
        %v1032 = vld [vmem:[#allocation3 + $0x42] sm:$0xff]
        %v1033 = vld [vmem:[#allocation3 + $0x52] sm:$0xff]
        %v1034 = vld [vmem:[#allocation3 + $0x62] sm:$0xff]
        %v1035 = vld [vmem:[#allocation3 + $0x72] sm:$0xff]
        %v1036 = vld [vmem:[%s986] sm:$0xff]
        %v1037 = vld [vmem:[%s986 + $0x10] sm:$0xff]
        %v1038 = vld [vmem:[%s986 + $0x20] sm:$0xff]
        %v1039 = vld [vmem:[%s986 + $0x30] sm:$0xff]
        %v1040 = vld [vmem:[%s986 + $0x40] sm:$0xff]
        %v1041 = vld [vmem:[%s986 + $0x50] sm:$0xff]
        %v1042 = vld [vmem:[%s986 + $0x60] sm:$0xff]
        %v1043 = vld [vmem:[%s986 + $0x70] sm:$0xff]
        %v1044 = vld [vmem:[%s986 + $0x1] sm:$0xff]
        %v1045 = vld [vmem:[%s986 + $0x11] sm:$0xff]
        %v1046 = vld [vmem:[%s986 + $0x21] sm:$0xff]
        %v1047 = vld [vmem:[%s986 + $0x31] sm:$0xff]
        %v1048 = vld [vmem:[%s986 + $0x41] sm:$0xff]
        %v1049 = vld [vmem:[%s986 + $0x51] sm:$0xff]
        %v1050 = vld [vmem:[%s986 + $0x61] sm:$0xff]
        %v1051 = vld [vmem:[%s986 + $0x71] sm:$0xff]
        %v1052 = vld [vmem:[%s986 + $0x2] sm:$0xff]
        %v1053 = vld [vmem:[%s986 + $0x12] sm:$0xff]
        %v1054 = vld [vmem:[%s986 + $0x22] sm:$0xff]
        %v1055 = vld [vmem:[%s986 + $0x32] sm:$0xff]
        %v1056 = vld [vmem:[%s986 + $0x42] sm:$0xff]
        %v1057 = vld [vmem:[%s986 + $0x52] sm:$0xff]
        %v1058 = vld [vmem:[%s986 + $0x62] sm:$0xff]
        %v1059 = vld [vmem:[%s986 + $0x72] sm:$0xff]
        %s1060 = scalar_lea.vmem [#allocation3], 32
        %v1061 = vld [vmem:[%s1060] sm:$0xff]
        %v1062 = vld [vmem:[%s1060 + $0x10] sm:$0xff]
        %v1063 = vld [vmem:[%s1060 + $0x20] sm:$0xff]
        %v1064 = vld [vmem:[%s1060 + $0x30] sm:$0xff]
        %v1065 = vld [vmem:[%s1060 + $0x40] sm:$0xff]
        %v1066 = vld [vmem:[%s1060 + $0x50] sm:$0xff]
        %v1067 = vld [vmem:[%s1060 + $0x60] sm:$0xff]
        %v1068 = vld [vmem:[%s1060 + $0x70] sm:$0xff]
        %v1069 = vld [vmem:[%s1060 + $0x1] sm:$0xff]
        %v1070 = vld [vmem:[%s1060 + $0x11] sm:$0xff]
        %v1071 = vld [vmem:[%s1060 + $0x21] sm:$0xff]
        %v1072 = vld [vmem:[%s1060 + $0x31] sm:$0xff]
        %v1073 = vld [vmem:[%s1060 + $0x41] sm:$0xff]
        %v1074 = vld [vmem:[%s1060 + $0x51] sm:$0xff]
        %v1075 = vld [vmem:[%s1060 + $0x61] sm:$0xff]
        %v1076 = vld [vmem:[%s1060 + $0x71] sm:$0xff]
        %v1077 = vld [vmem:[%s1060 + $0x2] sm:$0xff]
        %v1078 = vld [vmem:[%s1060 + $0x12] sm:$0xff]
        %v1079 = vld [vmem:[%s1060 + $0x22] sm:$0xff]
        %v1080 = vld [vmem:[%s1060 + $0x32] sm:$0xff]
        %v1081 = vld [vmem:[%s1060 + $0x42] sm:$0xff]
        %v1082 = vld [vmem:[%s1060 + $0x52] sm:$0xff]
        %v1083 = vld [vmem:[%s1060 + $0x62] sm:$0xff]
        %v1084 = vld [vmem:[%s1060 + $0x72] sm:$0xff]
        %1093 = vrot.lane.b32.xlu0 %v1020, 8
        %v1094 = vpop.permute.xlu0 %1093
        %1095 = vrot.lane.b32.xlu0 %v1021, 8
        %v1096 = vpop.permute.xlu0 %1095
        %1097 = vrot.lane.b32.xlu0 %v1022, 8
        %v1098 = vpop.permute.xlu0 %1097
        %1099 = vrot.lane.b32.xlu0 %v1023, 8
        %v1100 = vpop.permute.xlu0 %1099
        %1101 = vrot.lane.b32.xlu0 %v1024, 8
        %v1102 = vpop.permute.xlu0 %1101
        %1103 = vrot.lane.b32.xlu0 %v1025, 8
        %v1104 = vpop.permute.xlu0 %1103
        %1105 = vrot.lane.b32.xlu0 %v1026, 8
        %v1106 = vpop.permute.xlu0 %1105
        %1107 = vrot.lane.b32.xlu0 %v1027, 8
        %v1108 = vpop.permute.xlu0 %1107
        %1125 = vrot.lane.b32.xlu0 %v1028, 16
        %v1126 = vpop.permute.xlu0 %1125
        %1127 = vrot.lane.b32.xlu0 %v1029, 16
        %v1128 = vpop.permute.xlu0 %1127
        %1129 = vrot.lane.b32.xlu0 %v1030, 16
        %v1130 = vpop.permute.xlu0 %1129
        %1131 = vrot.lane.b32.xlu0 %v1031, 16
        %v1132 = vpop.permute.xlu0 %1131
        %1133 = vrot.lane.b32.xlu0 %v1032, 16
        %v1134 = vpop.permute.xlu0 %1133
        %1135 = vrot.lane.b32.xlu0 %v1033, 16
        %v1136 = vpop.permute.xlu0 %1135
        %1137 = vrot.lane.b32.xlu0 %v1034, 16
        %v1138 = vpop.permute.xlu0 %1137
        %1139 = vrot.lane.b32.xlu0 %v1035, 16
        %v1140 = vpop.permute.xlu0 %1139
        %1157 = vrot.lane.b32.xlu0 %v1036, 24
        %v1158 = vpop.permute.xlu0 %1157
        %1159 = vrot.lane.b32.xlu0 %v1037, 24
        %v1160 = vpop.permute.xlu0 %1159
        %1161 = vrot.lane.b32.xlu0 %v1038, 24
        %v1162 = vpop.permute.xlu0 %1161
        %1163 = vrot.lane.b32.xlu0 %v1039, 24
        %v1164 = vpop.permute.xlu0 %1163
        %1165 = vrot.lane.b32.xlu0 %v1040, 24
        %v1166 = vpop.permute.xlu0 %1165
        %1167 = vrot.lane.b32.xlu0 %v1041, 24
        %v1168 = vpop.permute.xlu0 %1167
        %1169 = vrot.lane.b32.xlu0 %v1042, 24
        %v1170 = vpop.permute.xlu0 %1169
        %1171 = vrot.lane.b32.xlu0 %v1043, 24
        %v1172 = vpop.permute.xlu0 %1171
        %1189 = vrot.lane.b32.xlu0 %v1044, 32
        %v1190 = vpop.permute.xlu0 %1189
        %1191 = vrot.lane.b32.xlu0 %v1045, 32
        %v1192 = vpop.permute.xlu0 %1191
        %1193 = vrot.lane.b32.xlu0 %v1046, 32
        %v1194 = vpop.permute.xlu0 %1193
        %1195 = vrot.lane.b32.xlu0 %v1047, 32
        %v1196 = vpop.permute.xlu0 %1195
        %1197 = vrot.lane.b32.xlu0 %v1048, 32
        %v1198 = vpop.permute.xlu0 %1197
        %1199 = vrot.lane.b32.xlu0 %v1049, 32
        %v1200 = vpop.permute.xlu0 %1199
        %1201 = vrot.lane.b32.xlu0 %v1050, 32
        %v1202 = vpop.permute.xlu0 %1201
        %1203 = vrot.lane.b32.xlu0 %v1051, 32
        %v1204 = vpop.permute.xlu0 %1203
        %1221 = vrot.lane.b32.xlu0 %v1052, 40
        %v1222 = vpop.permute.xlu0 %1221
        %1223 = vrot.lane.b32.xlu0 %v1053, 40
        %v1224 = vpop.permute.xlu0 %1223
        %1225 = vrot.lane.b32.xlu0 %v1054, 40
        %v1226 = vpop.permute.xlu0 %1225
        %1227 = vrot.lane.b32.xlu0 %v1055, 40
        %v1228 = vpop.permute.xlu0 %1227
        %1229 = vrot.lane.b32.xlu0 %v1056, 40
        %v1230 = vpop.permute.xlu0 %1229
        %1231 = vrot.lane.b32.xlu0 %v1057, 40
        %v1232 = vpop.permute.xlu0 %1231
        %1233 = vrot.lane.b32.xlu0 %v1058, 40
        %v1234 = vpop.permute.xlu0 %1233
        %1235 = vrot.lane.b32.xlu0 %v1059, 40
        %v1236 = vpop.permute.xlu0 %1235
        %1253 = vrot.lane.b32.xlu0 %v1061, 48
        %v1254 = vpop.permute.xlu0 %1253
        %1255 = vrot.lane.b32.xlu0 %v1062, 48
        %v1256 = vpop.permute.xlu0 %1255
        %1257 = vrot.lane.b32.xlu0 %v1063, 48
        %v1258 = vpop.permute.xlu0 %1257
        %1259 = vrot.lane.b32.xlu0 %v1064, 48
        %v1260 = vpop.permute.xlu0 %1259
        %1261 = vrot.lane.b32.xlu0 %v1065, 48
        %v1262 = vpop.permute.xlu0 %1261
        %1263 = vrot.lane.b32.xlu0 %v1066, 48
        %v1264 = vpop.permute.xlu0 %1263
        %1265 = vrot.lane.b32.xlu0 %v1067, 48
        %v1266 = vpop.permute.xlu0 %1265
        %1267 = vrot.lane.b32.xlu0 %v1068, 48
        %v1268 = vpop.permute.xlu0 %1267
        %1285 = vrot.lane.b32.xlu0 %v1069, 56
        %v1286 = vpop.permute.xlu0 %1285
        %1287 = vrot.lane.b32.xlu0 %v1070, 56
        %v1288 = vpop.permute.xlu0 %1287
        %1289 = vrot.lane.b32.xlu0 %v1071, 56
        %v1290 = vpop.permute.xlu0 %1289
        %1291 = vrot.lane.b32.xlu0 %v1072, 56
        %v1292 = vpop.permute.xlu0 %1291
        %1293 = vrot.lane.b32.xlu0 %v1073, 56
        %v1294 = vpop.permute.xlu0 %1293
        %1295 = vrot.lane.b32.xlu0 %v1074, 56
        %v1296 = vpop.permute.xlu0 %1295
        %1297 = vrot.lane.b32.xlu0 %v1075, 56
        %v1298 = vpop.permute.xlu0 %1297
        %1299 = vrot.lane.b32.xlu0 %v1076, 56
        %v1300 = vpop.permute.xlu0 %1299
        %1317 = vrot.lane.b32.xlu0 %v1077, 64
        %v1318 = vpop.permute.xlu0 %1317
        %1319 = vrot.lane.b32.xlu0 %v1078, 64
        %v1320 = vpop.permute.xlu0 %1319
        %1321 = vrot.lane.b32.xlu0 %v1079, 64
        %v1322 = vpop.permute.xlu0 %1321
        %1323 = vrot.lane.b32.xlu0 %v1080, 64
        %v1324 = vpop.permute.xlu0 %1323
        %1325 = vrot.lane.b32.xlu0 %v1081, 64
        %v1326 = vpop.permute.xlu0 %1325
        %1327 = vrot.lane.b32.xlu0 %v1082, 64
        %v1328 = vpop.permute.xlu0 %1327
        %1329 = vrot.lane.b32.xlu0 %v1083, 64
        %v1330 = vpop.permute.xlu0 %1329
        %1331 = vrot.lane.b32.xlu0 %v1084, 64
        %v1332 = vpop.permute.xlu0 %1331
        %v1341 = vsel %vm733, %v1012, %v1094
        %v1342 = vsel %vm733, %v1013, %v1096
        %v1343 = vsel %vm733, %v1014, %v1098
        %v1344 = vsel %vm733, %v1015, %v1100
        %v1345 = vsel %vm733, %v1016, %v1102
        %v1346 = vsel %vm733, %v1017, %v1104
        %v1347 = vsel %vm733, %v1018, %v1106
        %v1348 = vsel %vm733, %v1019, %v1108
        %v1349 = vsel %vm751, %v1341, %v1126
        %v1350 = vsel %vm751, %v1342, %v1128
        %v1351 = vsel %vm751, %v1343, %v1130
        %v1352 = vsel %vm751, %v1344, %v1132
        %v1353 = vsel %vm751, %v1345, %v1134
        %v1354 = vsel %vm751, %v1346, %v1136
        %v1355 = vsel %vm751, %v1347, %v1138
        %v1356 = vsel %vm751, %v1348, %v1140
        %v1357 = vsel %vm769, %v1349, %v1158
        %v1358 = vsel %vm769, %v1350, %v1160
        %v1359 = vsel %vm769, %v1351, %v1162
        %v1360 = vsel %vm769, %v1352, %v1164
        %v1361 = vsel %vm769, %v1353, %v1166
        %v1362 = vsel %vm769, %v1354, %v1168
        %v1363 = vsel %vm769, %v1355, %v1170
        %v1364 = vsel %vm769, %v1356, %v1172
        %v1365 = vsel %vm787, %v1357, %v1190
        %v1366 = vsel %vm787, %v1358, %v1192
        %v1367 = vsel %vm787, %v1359, %v1194
        %v1368 = vsel %vm787, %v1360, %v1196
        %v1369 = vsel %vm787, %v1361, %v1198
        %v1370 = vsel %vm787, %v1362, %v1200
        %v1371 = vsel %vm787, %v1363, %v1202
        %v1372 = vsel %vm787, %v1364, %v1204
        %vm1373 = vcmask 326656
        %v1374 = vsel %vm1373, %v1365, %v1222
        %v1375 = vsel %vm1373, %v1366, %v1224
        %v1376 = vsel %vm1373, %v1367, %v1226
        %v1377 = vsel %vm1373, %v1368, %v1228
        %v1378 = vsel %vm1373, %v1369, %v1230
        %v1379 = vsel %vm1373, %v1370, %v1232
        %v1380 = vsel %vm1373, %v1371, %v1234
        %v1381 = vsel %vm1373, %v1372, %v1236
        %vm1382 = vcmask 392192
        %v1383 = vsel %vm1382, %v1374, %v1254
        %v1384 = vsel %vm1382, %v1375, %v1256
        %v1385 = vsel %vm1382, %v1376, %v1258
        %v1386 = vsel %vm1382, %v1377, %v1260
        %v1387 = vsel %vm1382, %v1378, %v1262
        %v1388 = vsel %vm1382, %v1379, %v1264
        %v1389 = vsel %vm1382, %v1380, %v1266
        %v1390 = vsel %vm1382, %v1381, %v1268
        %vm1391 = vcmask 457728
        %v1392 = vsel %vm1391, %v1383, %v1286
        %v1393 = vsel %vm1391, %v1384, %v1288
        %v1394 = vsel %vm1391, %v1385, %v1290
        %v1395 = vsel %vm1391, %v1386, %v1292
        %v1396 = vsel %vm1391, %v1387, %v1294
        %v1397 = vsel %vm1391, %v1388, %v1296
        %v1398 = vsel %vm1391, %v1389, %v1298
        %v1399 = vsel %vm1391, %v1390, %v1300
        %vm1400 = vcmask 523264
        %v1401 = vsel %vm1400, %v1392, %v1318
        %v1402 = vsel %vm1400, %v1393, %v1320
        %v1403 = vsel %vm1400, %v1394, %v1322
        %v1404 = vsel %vm1400, %v1395, %v1324
        %v1405 = vsel %vm1400, %v1396, %v1326
        %v1406 = vsel %vm1400, %v1397, %v1328
        %v1407 = vsel %vm1400, %v1398, %v1330
        %v1408 = vsel %vm1400, %v1399, %v1332
        %v1409 = vpack.c.bf16 %v1402, %v1401
        %v1410 = vpack.c.bf16 %v1404, %v1403
        %v1411 = vpack.c.bf16 %v1406, %v1405
        %v1412 = vpack.c.bf16 %v1408, %v1407
        %v1413 = vld [vmem:[%s4] sm:$0xf]
        %v1414 = vld [vmem:[%s4 + $0x4] sm:$0xf]
        %v1415 = vld [vmem:[%s4 + $0x8] sm:$0xf]
        %v1416 = vld [vmem:[%s4 + $0xc] sm:$0xf]
        %v1417 = vld [vmem:[%s4 + $0x10] sm:$0xf]
        %v1418 = vld [vmem:[%s4 + $0x14] sm:$0xf]
        %v1419 = vld [vmem:[%s4 + $0x18] sm:$0xf]
        %v1420 = vld [vmem:[%s4 + $0x1c] sm:$0xf]
        %v1421 = vld [vmem:[%s4 + $0x20] sm:$0xf]
        %v1431 = vunpack.c.l.b16 %v1413
        %v1432 = vunpack.c.l.b16 %v1414
        %v1433 = vunpack.c.l.b16 %v1415
        %v1434 = vunpack.c.l.b16 %v1416
        %v1435 = vunpack.c.l.b16 %v1417
        %v1436 = vunpack.c.l.b16 %v1418
        %v1437 = vunpack.c.l.b16 %v1419
        %v1438 = vunpack.c.l.b16 %v1420
        %v1439 = vunpack.c.l.b16 %v1421
        %v1440 = vpack.c.b16 %v1432, %v1431
        %v1441 = vpack.c.b16 %v1434, %v1433
        %v1442 = vpack.c.b16 %v1436, %v1435
        %v1443 = vpack.c.b16 %v1438, %v1437
        %v1444 = vpack.c.b16 %v1439, %v1439
        %vm1449 = vcmask 588800
        %v1451 = vsel %vm1449, %v1409, 0
        %v1454 = vsel %vm1449, %v1410, 0
        %v1457 = vsel %vm1449, %v1411, 0
        %v1460 = vsel %vm1449, %v1412, 0
        %vm1462 = vcmask 1043456
        %v1464 = vsel %vm1462, %v1444, 0
        %1466 = vmatprep.subr.bf16.mxu0 0
        %1467 = vmatpush1.bf16.msra.mxu0 %v1440
        %1468 = vmatprep.subr.bf16.mxu0 0
        %1469 = vmatpush1.bf16.msra.mxu0 %v1441
        %1470 = vmatprep.subr.bf16.mxu0 0
        %1471 = vmatpush1.bf16.msra.mxu0 %v1442
        %1472 = vmatprep.subr.bf16.mxu0 0
        %1473 = vmatpush1.bf16.msra.mxu0 %v1443
        %1474 = vmatprep.subr.bf16.mxu0 0
        %1475 = vmatpush1.bf16.msra.mxu0 %v1464
        %1476 = vmatprep.subr.bf16.mxu0 0
        %1477 = vmatpush1.bf16.msra.mxu0 0
        %1478 = vmatprep.subr.bf16.mxu0 0
        %1479 = vmatpush1.bf16.msra.mxu0 0
        %1480 = vmatprep.subr.bf16.mxu0 0
        %1481 = vmatpush1.bf16.msra.mxu0 0
        %1482 = vmatprep.subr.bf16.mxu0 0
        %1483 = vmatpush1.bf16.msra.mxu0 0
        %1484 = vmatprep.subr.bf16.mxu0 0
        %1485 = vmatpush1.bf16.msra.mxu0 0
        %1486 = vmatprep.subr.bf16.mxu0 0
        %1487 = vmatpush1.bf16.msra.mxu0 0
        %1488 = vmatprep.subr.bf16.mxu0 0
        %1489 = vmatpush1.bf16.msra.mxu0 0
        %1490 = vmatprep.subr.bf16.mxu0 0
        %1491 = vmatpush1.bf16.msra.mxu0 0
        %1492 = vmatprep.subr.bf16.mxu0 0
        %1493 = vmatpush1.bf16.msra.mxu0 0
        %1494 = vmatprep.subr.bf16.mxu0 0
        %1495 = vmatpush1.bf16.msra.mxu0 0
        %1496 = vmatprep.subr.bf16.mxu0 0
        %1497 = vmatpush1.bf16.msra.mxu0 0
        %1498 = vmatprep.mubr.bf16.mxu0 0
        %1499 = vmatmul.mubr.bf16.gmra.mrb[0].mxu0 %v1451
        %v1500 = vpop.f32.mrb[0].mxu0
        %v1501 = vadd.f32 0.0, %v1500
        %v1502 = vpop.f32.mrb[0].mxu0
        %v1503 = vpop.f32.mrb[0].mxu0
        %v1504 = vadd.f32 0.0, %v1503
        %v1505 = vpop.f32.mrb[0].mxu0
        %1506 = vmatprep.mubr.bf16.mxu0 0
        %1507 = vmatmul.mubr.bf16.gmra.mrb[0].mxu0 %v1454
        %v1508 = vpop.f32.mrb[0].mxu0
        %v1509 = vadd.f32 0.0, %v1508
        %v1510 = vpop.f32.mrb[0].mxu0
        %v1511 = vpop.f32.mrb[0].mxu0
        %v1512 = vadd.f32 0.0, %v1511
        %v1513 = vpop.f32.mrb[0].mxu0
        %1514 = vmatprep.mubr.bf16.mxu0 0
        %1515 = vmatmul.mubr.bf16.gmra.mrb[0].mxu0 %v1457
        %v1516 = vpop.f32.mrb[0].mxu0
        %v1517 = vadd.f32 0.0, %v1516
        %v1518 = vpop.f32.mrb[0].mxu0
        %v1519 = vpop.f32.mrb[0].mxu0
        %v1520 = vadd.f32 0.0, %v1519
        %v1521 = vpop.f32.mrb[0].mxu0
        %1522 = vmatprep.mubr.bf16.mxu0 0
        %1523 = vmatmul.mubr.bf16.gmra.mrb[0].mxu0 %v1460
        %v1524 = vpop.f32.mrb[0].mxu0
        %v1525 = vadd.f32 0.0, %v1524
        %v1526 = vpop.f32.mrb[0].mxu0
        %v1527 = vpop.f32.mrb[0].mxu0
        %v1528 = vadd.f32 0.0, %v1527
        %v1529 = vpop.f32.mrb[0].mxu0
        %1530 = vdwg.mxu0
        %v1531 = vld [vmem:[%s5] sm:$0x1]
        %v1533 = vlaneseq
        %v1534 = vshrl.u32 %v1533, 7
        %v1535 = vsub.s32 0, %v1534
        %v1536 = vrot.slane %v1531, %v1535
        %v1538 = vmul.f32 %v1501, %v1536
        %v1539 = vmul.f32 %v1504, %v1536
        %v1540 = vmul.f32 %v1509, %v1536
        %v1541 = vmul.f32 %v1512, %v1536
        %v1542 = vmul.f32 %v1517, %v1536
        %v1543 = vmul.f32 %v1520, %v1536
        %v1544 = vmul.f32 %v1525, %v1536
        %v1545 = vmul.f32 %v1528, %v1536
        %v1546 = vld [vmem:[%s6] sm:$0x1]
        %v1548 = vlaneseq
        %v1549 = vshrl.u32 %v1548, 7
        %v1550 = vsub.s32 0, %v1549
        %v1551 = vrot.slane %v1546, %v1550
        %v1553 = vadd.f32 %v1538, %v1551
        %v1554 = vadd.f32 %v1539, %v1551
        %v1555 = vadd.f32 %v1540, %v1551
        %v1556 = vadd.f32 %v1541, %v1551
        %v1557 = vadd.f32 %v1542, %v1551
        %v1558 = vadd.f32 %v1543, %v1551
        %v1559 = vadd.f32 %v1544, %v1551
        %v1560 = vadd.f32 %v1545, %v1551
        %v1561 = vmax.f32 %v1553, 0.0
        %v1562 = vmax.f32 %v1554, 0.0
        %v1563 = vmax.f32 %v1555, 0.0
        %v1564 = vmax.f32 %v1556, 0.0
        %v1565 = vmax.f32 %v1557, 0.0
        %v1566 = vmax.f32 %v1558, 0.0
        %v1567 = vmax.f32 %v1559, 0.0
        %v1568 = vmax.f32 %v1560, 0.0
        %1569 = vst.msk [vmem:[%s298] sm:$0xff] %vm733, %v1561
        %1570 = vst.msk [vmem:[%s298 + $0x8] sm:$0xff] %vm733, %v1562
        %1571 = vst.msk [vmem:[%s298 + $0x10] sm:$0xff] %vm733, %v1563
        %1572 = vst.msk [vmem:[%s298 + $0x18] sm:$0xff] %vm733, %v1564
        %1573 = vst.msk [vmem:[%s298 + $0x20] sm:$0xff] %vm733, %v1565
        %1574 = vst.msk [vmem:[%s298 + $0x28] sm:$0xff] %vm733, %v1566
        %1575 = vst.msk [vmem:[%s298 + $0x30] sm:$0xff] %vm733, %v1567
        %1576 = vst.msk [vmem:[%s298 + $0x38] sm:$0xff] %vm733, %v1568
        %p1577 = scmp.lt.s32.totalorder %s21, 1
        %s1578 = scalar_select %p1577, %s21, 1
        %s1579 = smul.addr %s1578, 8
        %s1580 = smul.addr %s1579, 8
        %s1581 = scalar_lea.vmem %s7, %s1580
        // Predicated region
        $region53: #{tpu_custom_call.1} parent=47 // pred_check
          %p1582 = pneg %p191
        $region54: #{tpu_custom_call.1} parent=47 // pred_check_branch
          %1584 = sbr.rel (%p1582) target = $region56
        $region55: #{tpu_custom_call.1} parent=47 // pred_region
          _
        $region56: #{tpu_custom_call.1} parent=47 // pred_fallthru
          _
      $region48: #{tpu_custom_call.1} parent=5 // pred_fallthru
        _
      %p1585 = scmp.le.s32.totalorder 2, %s16
      // Predicated region
      $region57: #{tpu_custom_call.1} parent=5 // pred_check
        %p1586 = pneg %p1585
      $region58: #{tpu_custom_call.1} parent=5 // pred_check_branch
        %1588 = sbr.rel (%p1586) target = $region60
      $region59: #{tpu_custom_call.1} parent=5 // pred_region
        %s1589 = ssub.s32 %s16, 2
        // Predicated region
        $region61: #{tpu_custom_call.1} parent=59 // pred_check
          %p1590 = pneg %p197
        $region62: #{tpu_custom_call.1} parent=59 // pred_check_branch
          %1592 = sbr.rel (%p1590) target = $region64
        $region63: #{tpu_custom_call.1} parent=59 // pred_region
          %p1593 = scmp.lt.s32.totalorder %s22, 1
          %s1594 = scalar_select %p1593, %s22, 1
          %s1595 = smul.addr %s1594, 8
          %s1596 = smul.addr %s1595, 8
          %s1597 = scalar_lea.vmem %s7, %s1596
        $region64: #{tpu_custom_call.1} parent=59 // pred_fallthru
          _
      $region60: #{tpu_custom_call.1} parent=5 // pred_fallthru
        _
    $region6: #{tpu_custom_call.1} parent=1 // loop_footer
      %s20 = sadd.s32 1, %s16
    $region7: #{tpu_custom_call.1} parent=1 // loop_footer_branch
      %15 = sbr.rel target = $region3
    $region8: #{tpu_custom_call.1} parent=1 // loop_exit
      _
    %1598 = vsyncpa [#allocation5], 1
    %s1599 = scalar_lea.sflag [#allocation5], 1
    %1600 = vsyncpa %s1599, 1

</llo_original>
